<compile_context>
chip_gen: v7x
topology: tpu7x:2x2x1
jax: 0.10.0
libtpu: 0.0.40
codegen_flags: <defaults>
</compile_context>

<pallas_src>
import functools

import jax
import jax.numpy as jnp
from jax.experimental import pallas as pl
from jax.experimental.pallas import tpu as pltpu


def _vfe_moments_kernel(x_ref, sum_ref, gram_ref, *, m_total, tm, n_half):
    """Pass 1: per-core streaming accumulation of sum_x = 1^T x and G = x^T x.

    x_ref:    (tm, C_in)        VMEM tile of the points
    sum_ref:  (1, 1, C_in)      per-core partial row-sum   (VMEM-resident accumulator)
    gram_ref: (1, C_in, C_in)   per-core partial x^T x     (VMEM-resident accumulator)
    """
    c = pl.program_id(0)          # megacore split (parallel)
    i = pl.program_id(1)          # tile index within this core's half (arbitrary / reduction)

    @pl.when(i == 0)
    def _init():
        sum_ref[...] = jnp.zeros_like(sum_ref)
        gram_ref[...] = jnp.zeros_like(gram_ref)

    x = x_ref[...]
    abs_tile = c * n_half + i                  # un-clamped global tile index
    rows_valid = m_total - abs_tile * tm       # <= 0 for fully-OOB padding tiles

    def _accumulate(xv):
        # Row-sum via a thin MXU matmul (deep K = tm) instead of an XLU sublane reduction.
        ones_row = jnp.ones((1, xv.shape[0]), dtype=xv.dtype)
        s = jnp.dot(ones_row, xv, preferred_element_type=jnp.float32)            # (1, C_in)
        # Gram matrix: contract the row dimension of x with itself (deep-K MXU op).
        g = jax.lax.dot_general(xv, xv, (((0,), (0,)), ((), ())),
                                preferred_element_type=jnp.float32)              # (C_in, C_in)
        sum_ref[...] += s[None]
        gram_ref[...] += g[None]

    @pl.when(rows_valid >= tm)     # interior tile: no masking work at all
    def _full():
        _accumulate(x)

    @pl.when(rows_valid < tm)      # ragged last tile or clamped OOB padding tile
    def _ragged():
        row_ids = jax.lax.broadcasted_iota(jnp.int32, x.shape, 0)
        _accumulate(jnp.where(row_ids < rows_valid, x, jnp.zeros_like(x)))


def _vfe_apply_kernel(x_ref, w_ref, ss_ref, o_ref):
    """Pass 2: h = x @ W, then folded BN affine + ReLU; f32 math, cast on the store."""
    h = jnp.dot(x_ref[...], w_ref[...], preferred_element_type=jnp.float32)
    y = h * ss_ref[0:1, :] + ss_ref[1:2, :]
    o_ref[...] = jnp.maximum(y, 0.0).astype(o_ref.dtype)


def dynamic_vfe_layer(inputs, weight_t, gamma, beta, *, eps=1e-3,
                      out_dtype=jnp.bfloat16, max_tm=4096):
    """Linear(bias=False) + BatchNorm1d(training-mode stats) + ReLU.

    inputs:   (M, C_in) float
    weight_t: (C_in, C_out)  (torch nn.Linear weight, transposed)
    gamma, beta: (C_out,) BN affine parameters
    """
    M, C_in = inputs.shape
    C_out = weight_t.shape[1]

    if inputs.dtype not in (jnp.float32, jnp.bfloat16):
        inputs = inputs.astype(jnp.float32)
    weight_t = weight_t.astype(jnp.float32)
    gamma = gamma.astype(jnp.float32)
    beta = beta.astype(jnp.float32)

    # Lane-dense output: pad C_out up to a multiple of 128 (zero weight cols -> zero output).
    # With bf16 output the extra padded write bytes are cheap and stores stay unmasked.
    c_pad = ((C_out + 127) // 128) * 128
    if c_pad != C_out:
        weight_t = jnp.pad(weight_t, ((0, 0), (0, c_pad - C_out)))
        gamma = jnp.pad(gamma, (0, c_pad - C_out))
        beta = jnp.pad(beta, (0, c_pad - C_out))

    # ---- M tile: largest multiple of 8 (capped at max_tm) whose double-buffered,
    # lane-padded in+out streams fit a ~20 MiB budget (headroom under 32 MiB scoped VMEM,
    # safe on v7x's 64 MiB physical VMEM as well).
    in_bytes = jnp.dtype(inputs.dtype).itemsize
    out_bytes = jnp.dtype(out_dtype).itemsize
    x_row = ((C_in + 127) // 128) * 128 * in_bytes      # x tile is lane-padded in VMEM
    o_row = c_pad * out_bytes
    stream_budget = 20 * 1024 * 1024
    tm = min(max_tm, stream_budget // (2 * (x_row + o_row)))
    tm = max(8, (tm // 8) * 8)
    tm = min(tm, ((M + 7) // 8) * 8)                    # single 8-aligned tile for small M
    n_tiles = pl.cdiv(M, tm)

    vmem_limit = 32 * 1024 * 1024

    # ---- pass 1: streaming moments (sum_x, x^T x), megacore-split over two halves of M ----
    n_split = 2 if n_tiles >= 2 else 1                  # v7x: each TC reduces half the tiles
    n_half = pl.cdiv(n_tiles, n_split)

    def x_map(c, i):
        # Clamp so padding iterations (odd tile counts) never issue a fully-OOB block read;
        # their rows are masked out of the statistics in-kernel anyway.
        return (jnp.minimum(c * n_half + i, n_tiles - 1), 0)

    part_sums, part_gram = pl.pallas_call(
        functools.partial(_vfe_moments_kernel, m_total=M, tm=tm, n_half=n_half),
        out_shape=(jax.ShapeDtypeStruct((n_split, 1, C_in), jnp.float32),
                   jax.ShapeDtypeStruct((n_split, C_in, C_in), jnp.float32)),
        grid_spec=pltpu.PrefetchScalarGridSpec(
            num_scalar_prefetch=0,
            grid=(n_split, n_half),
            in_specs=[pl.BlockSpec((tm, C_in), x_map)],
            out_specs=[pl.BlockSpec((1, 1, C_in), lambda c, i: (c, 0, 0)),
                       pl.BlockSpec((1, C_in, C_in), lambda c, i: (c, 0, 0))],
        ),
        compiler_params=pltpu.CompilerParams(
            dimension_semantics=("parallel", "arbitrary"),
            vmem_limit_bytes=vmem_limit,
        ),
    )(inputs)

    # ---- tiny wrapper fold: combine per-core partials, recover BN stats, fold scale/shift ----
    m = jnp.float32(M)
    sum_x = jnp.sum(part_sums, axis=0).reshape(1, C_in)        # (1, C_in)
    gram = jnp.sum(part_gram, axis=0)                          # (C_in, C_in)
    mean = (sum_x @ weight_t) / m                              # (1, c_pad)
    ex2 = jnp.sum(weight_t * (gram @ weight_t), axis=0, keepdims=True) / m   # diag(W^T G W)/M
    var = jnp.maximum(ex2 - mean * mean, 0.0)                  # biased BN var, clamped
    scale = gamma.reshape(1, c_pad) * jax.lax.rsqrt(var + eps)
    shift = beta.reshape(1, c_pad) - mean * scale
    ss = jnp.concatenate([scale, shift], axis=0)               # (2, c_pad)

    # ---- pass 2: h = x @ W per tile, folded affine + ReLU, lane-dense (bf16 by default) store ----
    out = pl.pallas_call(
        _vfe_apply_kernel,
        out_shape=jax.ShapeDtypeStruct((M, c_pad), out_dtype),
        grid_spec=pltpu.PrefetchScalarGridSpec(
            num_scalar_prefetch=0,
            grid=(n_tiles,),
            in_specs=[
                pl.BlockSpec((tm, C_in), lambda i: (i, 0)),
                pl.BlockSpec((C_in, c_pad), lambda i: (0, 0)),
                pl.BlockSpec((2, c_pad), lambda i: (0, 0)),
            ],
            out_specs=pl.BlockSpec((tm, c_pad), lambda i: (i, 0)),
        ),
        compiler_params=pltpu.CompilerParams(
            dimension_semantics=("parallel",),    # megacore splits the apply pass on v7x
            vmem_limit_bytes=vmem_limit,
        ),
    )(inputs, weight_t, ss)

    if c_pad != C_out:
        out = out[:, :C_out]
    return out


def reference_forward(inputs, weight_t, gamma, beta, eps=1e-3):
    h = inputs @ weight_t
    mean = jnp.mean(h, axis=0, keepdims=True)
    var = jnp.mean((h - mean) ** 2, axis=0, keepdims=True)  # biased, as in BN forward
    y = (h - mean) / jnp.sqrt(var + eps) * gamma[None, :] + beta[None, :]
    return jnp.maximum(y, 0.0)


if __name__ == "__main__":
    key = jax.random.PRNGKey(0)

    def run_case(case_key, M, C_in, C_out, out_dtype, max_tm=4096, atol=2e-3, rtol=2e-3):
        k_x, k_w, k_g, k_b = jax.random.split(case_key, 4)
        inputs = jax.random.normal(k_x, (M, C_in), dtype=jnp.float32)

        # Synthetic parameters mirroring nn.Linear(bias=False) / BatchNorm1d shapes.
        bound = 1.0 / jnp.sqrt(jnp.float32(C_in))
        weight = jax.random.uniform(k_w, (C_out, C_in), minval=-bound, maxval=bound,
                                    dtype=jnp.float32)          # torch layout (out, in)
        weight_t = weight.T                                      # (C_in, C_out) for the kernel
        gamma = jax.random.uniform(k_g, (C_out,), minval=0.5, maxval=1.5, dtype=jnp.float32)
        beta = jax.random.uniform(k_b, (C_out,), minval=-0.5, maxval=0.5, dtype=jnp.float32)

        out = dynamic_vfe_layer(inputs, weight_t, gamma, beta, eps=1e-3,
                                out_dtype=out_dtype, max_tm=max_tm)
        out = jax.block_until_ready(out)
        assert out.shape == (M, C_out)
        assert out.dtype == out_dtype

        ref = reference_forward(inputs, weight_t, gamma, beta, eps=1e-3)
        out_f32 = out.astype(jnp.float32)
        err = float(jnp.max(jnp.abs(out_f32 - ref)))
        assert jnp.allclose(out_f32, ref, atol=atol, rtol=rtol), f"max abs err {err}"

    k1, k2, k3 = jax.random.split(key, 3)
    # f32 output + forced small tiles: exercises multi-tile pipelining, the 2-way megacore
    # split of the stats pass and multi-iteration moment accumulation (tight tolerance).
    run_case(k1, M=2048, C_in=64, C_out=128, out_dtype=jnp.float32, max_tm=512)
    # bf16 output (perf default): single ragged tile, C_out padded 64 -> 128.
    run_case(k2, M=1000, C_in=10, C_out=64, out_dtype=jnp.bfloat16, atol=2e-2, rtol=2e-2)
    # bf16 output at default tm: odd tile count -> ragged last tile + clamped/masked OOB tile.
    run_case(k3, M=9000, C_in=16, C_out=128, out_dtype=jnp.bfloat16, atol=2e-2, rtol=2e-2)

    print("KERNEL_OK")
</pallas_src>

<mosaic_0001>
module attributes {stable_mosaic.version = 11 : i64} {
  func.func @_vfe_moments_kernel(%arg0: i32, %arg1: i32, %arg2: memref<512x64xf32, #tpu.memory_space<vmem>>, %arg3: memref<1x1x64xf32, #tpu.memory_space<vmem>>, %arg4: memref<1x64x64xf32, #tpu.memory_space<vmem>>) attributes {dimension_semantics = [#tpu.dimension_semantics<parallel>, #tpu.dimension_semantics<arbitrary>], iteration_bounds = array<i64: 2, 2>, scalar_prefetch = 0 : i64, scratch_operands = 0 : i64, tpu.core_type = #tpu.core_type<tc>, window_params = [{transform_indices = @transform_0, window_bounds = array<i64: 512, 64>}, {transform_indices = @transform_1, window_bounds = array<i64: 1, 1, 64>}, {transform_indices = @transform_2, window_bounds = array<i64: 1, 64, 64>}]} {
    %c0_i32 = arith.constant 0 : i32
    %0 = arith.cmpi eq, %arg1, %c0_i32 : i32
    %1 = arith.extui %0 : i1 to i32
    %c0_i32_0 = arith.constant 0 : i32
    %2 = arith.cmpi ne, %1, %c0_i32_0 : i32
    scf.if %2 {
      %cst = arith.constant 0.000000e+00 : f32
      %14 = vector.broadcast %cst : f32 to vector<1x1x64xf32>
      %c0_6 = arith.constant 0 : index
      %c0_7 = arith.constant 0 : index
      %c0_8 = arith.constant 0 : index
      %15 = vector.load %arg3[%c0_6, %c0_7, %c0_8] : memref<1x1x64xf32, #tpu.memory_space<vmem>>, vector<1x1x64xf32>
      tpu.vector_store %arg3[%c0_6, %c0_7, %c0_8], %14 {strides = array<i32>} : memref<1x1x64xf32, #tpu.memory_space<vmem>>, vector<1x1x64xf32>,
      %cst_9 = arith.constant 0.000000e+00 : f32
      %16 = vector.broadcast %cst_9 : f32 to vector<1x64x64xf32>
      %c0_10 = arith.constant 0 : index
      %c0_11 = arith.constant 0 : index
      %c0_12 = arith.constant 0 : index
      %17 = vector.load %arg4[%c0_10, %c0_11, %c0_12] : memref<1x64x64xf32, #tpu.memory_space<vmem>>, vector<1x64x64xf32>
      tpu.vector_store %arg4[%c0_10, %c0_11, %c0_12], %16 {strides = array<i32>} : memref<1x64x64xf32, #tpu.memory_space<vmem>>, vector<1x64x64xf32>,
    } else {
    }
    %c0 = arith.constant 0 : index
    %c0_1 = arith.constant 0 : index
    %3 = vector.load %arg2[%c0, %c0_1] : memref<512x64xf32, #tpu.memory_space<vmem>>, vector<512x64xf32>
    %c2_i32 = arith.constant 2 : i32
    %4 = arith.muli %arg0, %c2_i32 : i32
    %5 = arith.addi %4, %arg1 : i32
    %c512_i32 = arith.constant 512 : i32
    %6 = arith.muli %5, %c512_i32 : i32
    %c2048_i32 = arith.constant 2048 : i32
    %7 = arith.subi %c2048_i32, %6 : i32
    %c512_i32_2 = arith.constant 512 : i32
    %8 = arith.cmpi sge, %7, %c512_i32_2 : i32
    %9 = arith.extui %8 : i1 to i32
    %c0_i32_3 = arith.constant 0 : i32
    %10 = arith.cmpi ne, %9, %c0_i32_3 : i32
    scf.if %10 {
      %cst = arith.constant 1.000000e+00 : f32
      %14 = vector.broadcast %cst : f32 to vector<1x512xf32>
      %cst_6 = arith.constant dense<0.000000e+00> : vector<1x64xf32>
      %15 = tpu.matmul %14, %3, %cst_6 {dimension_numbers = #tpu.dot_dimension_numbers<[1], [0], [0], [1], [0, 0, 1, 1], [], []>} : vector<1x512xf32>, vector<512x64xf32>, vector<1x64xf32> -> vector<1x64xf32>
      %cst_7 = arith.constant dense<0.000000e+00> : vector<64x64xf32>
      %16 = tpu.matmul %3, %3, %cst_7 {dimension_numbers = #tpu.dot_dimension_numbers<[0], [0], [1], [1], [0, 1, 1, 1], [], []>} : vector<512x64xf32>, vector<512x64xf32>, vector<64x64xf32> -> vector<64x64xf32>
      %c0_8 = arith.constant 0 : index
      %c0_9 = arith.constant 0 : index
      %c0_10 = arith.constant 0 : index
      %17 = vector.load %arg3[%c0_8, %c0_9, %c0_10] : memref<1x1x64xf32, #tpu.memory_space<vmem>>, vector<1x1x64xf32>
      %18 = vector.shape_cast %15 : vector<1x64xf32> to vector<1x1x64xf32>
      %19 = arith.addf %17, %18 : vector<1x1x64xf32>
      %c0_11 = arith.constant 0 : index
      %c0_12 = arith.constant 0 : index
      %c0_13 = arith.constant 0 : index
      %20 = vector.load %arg3[%c0_11, %c0_12, %c0_13] : memref<1x1x64xf32, #tpu.memory_space<vmem>>, vector<1x1x64xf32>
      tpu.vector_store %arg3[%c0_11, %c0_12, %c0_13], %19 {strides = array<i32>} : memref<1x1x64xf32, #tpu.memory_space<vmem>>, vector<1x1x64xf32>,
      %c0_14 = arith.constant 0 : index
      %c0_15 = arith.constant 0 : index
      %c0_16 = arith.constant 0 : index
      %21 = vector.load %arg4[%c0_14, %c0_15, %c0_16] : memref<1x64x64xf32, #tpu.memory_space<vmem>>, vector<1x64x64xf32>
      %22 = vector.shape_cast %16 : vector<64x64xf32> to vector<1x64x64xf32>
      %23 = arith.addf %21, %22 : vector<1x64x64xf32>
      %c0_17 = arith.constant 0 : index
      %c0_18 = arith.constant 0 : index
      %c0_19 = arith.constant 0 : index
      %24 = vector.load %arg4[%c0_17, %c0_18, %c0_19] : memref<1x64x64xf32, #tpu.memory_space<vmem>>, vector<1x64x64xf32>
      tpu.vector_store %arg4[%c0_17, %c0_18, %c0_19], %23 {strides = array<i32>} : memref<1x64x64xf32, #tpu.memory_space<vmem>>, vector<1x64x64xf32>,
    } else {
    }
    %c512_i32_4 = arith.constant 512 : i32
    %11 = arith.cmpi slt, %7, %c512_i32_4 : i32
    %12 = arith.extui %11 : i1 to i32
    %c0_i32_5 = arith.constant 0 : i32
    %13 = arith.cmpi ne, %12, %c0_i32_5 : i32
    scf.if %13 {
      %14 = tpu.iota {dimensions = array<i32: 0>} : vector<512x64xi32>
      %15 = vector.broadcast %7 : i32 to vector<512x64xi32>
      %16 = arith.cmpi slt, %14, %15 : vector<512x64xi32>
      %cst = arith.constant 0.000000e+00 : f32
      %17 = vector.broadcast %cst : f32 to vector<512x64xf32>
      %18 = arith.select %16, %3, %17 : vector<512x64xi1>, vector<512x64xf32>
      %cst_6 = arith.constant 1.000000e+00 : f32
      %19 = vector.broadcast %cst_6 : f32 to vector<1x512xf32>
      %cst_7 = arith.constant dense<0.000000e+00> : vector<1x64xf32>
      %20 = tpu.matmul %19, %18, %cst_7 {dimension_numbers = #tpu.dot_dimension_numbers<[1], [0], [0], [1], [0, 0, 1, 1], [], []>} : vector<1x512xf32>, vector<512x64xf32>, vector<1x64xf32> -> vector<1x64xf32>
      %cst_8 = arith.constant dense<0.000000e+00> : vector<64x64xf32>
      %21 = tpu.matmul %18, %18, %cst_8 {dimension_numbers = #tpu.dot_dimension_numbers<[0], [0], [1], [1], [0, 1, 1, 1], [], []>} : vector<512x64xf32>, vector<512x64xf32>, vector<64x64xf32> -> vector<64x64xf32>
      %c0_9 = arith.constant 0 : index
      %c0_10 = arith.constant 0 : index
      %c0_11 = arith.constant 0 : index
      %22 = vector.load %arg3[%c0_9, %c0_10, %c0_11] : memref<1x1x64xf32, #tpu.memory_space<vmem>>, vector<1x1x64xf32>
      %23 = vector.shape_cast %20 : vector<1x64xf32> to vector<1x1x64xf32>
      %24 = arith.addf %22, %23 : vector<1x1x64xf32>
      %c0_12 = arith.constant 0 : index
      %c0_13 = arith.constant 0 : index
      %c0_14 = arith.constant 0 : index
      %25 = vector.load %arg3[%c0_12, %c0_13, %c0_14] : memref<1x1x64xf32, #tpu.memory_space<vmem>>, vector<1x1x64xf32>
      tpu.vector_store %arg3[%c0_12, %c0_13, %c0_14], %24 {strides = array<i32>} : memref<1x1x64xf32, #tpu.memory_space<vmem>>, vector<1x1x64xf32>,
      %c0_15 = arith.constant 0 : index
      %c0_16 = arith.constant 0 : index
      %c0_17 = arith.constant 0 : index
      %26 = vector.load %arg4[%c0_15, %c0_16, %c0_17] : memref<1x64x64xf32, #tpu.memory_space<vmem>>, vector<1x64x64xf32>
      %27 = vector.shape_cast %21 : vector<64x64xf32> to vector<1x64x64xf32>
      %28 = arith.addf %26, %27 : vector<1x64x64xf32>
      %c0_18 = arith.constant 0 : index
      %c0_19 = arith.constant 0 : index
      %c0_20 = arith.constant 0 : index
      %29 = vector.load %arg4[%c0_18, %c0_19, %c0_20] : memref<1x64x64xf32, #tpu.memory_space<vmem>>, vector<1x64x64xf32>
      tpu.vector_store %arg4[%c0_18, %c0_19, %c0_20], %28 {strides = array<i32>} : memref<1x64x64xf32, #tpu.memory_space<vmem>>, vector<1x64x64xf32>,
    } else {
    }
    return
  }
  func.func @transform_0(%arg0: i32, %arg1: i32) -> (i32, i32) {
    %c2_i32 = arith.constant 2 : i32
    %0 = arith.muli %arg0, %c2_i32 : i32
    %1 = arith.addi %0, %arg1 : i32
    %c3_i32 = arith.constant 3 : i32
    %2 = arith.minsi %1, %c3_i32 : i32
    %c0_i32 = arith.constant 0 : i32
    %c0_i32_0 = arith.constant 0 : i32
    return %2, %c0_i32 : i32, i32
  }
  func.func @transform_1(%arg0: i32, %arg1: i32) -> (i32, i32, i32) {
    %c0_i32 = arith.constant 0 : i32
    %c0_i32_0 = arith.constant 0 : i32
    %c0_i32_1 = arith.constant 0 : i32
    return %arg0, %c0_i32, %c0_i32_0 : i32, i32, i32
  }
  func.func @transform_2(%arg0: i32, %arg1: i32) -> (i32, i32, i32) {
    %c0_i32 = arith.constant 0 : i32
    %c0_i32_0 = arith.constant 0 : i32
    %c0_i32_1 = arith.constant 0 : i32
    return %arg0, %c0_i32, %c0_i32_0 : i32, i32, i32
  }
}

</mosaic_0001>

<llo_original>
// kernel: tpu_custom_call.1
$region0: #{tpu_custom_call.1}
  #allocation0 [shape = 'u32[]', space=smem, size = 0x4, offset = 0x4, fixed_abs, tag = 'smem constant byte address 0x4 - core index']
  #allocation1 [shape = 'u32[144,128]{1,0:T(1,128)}', space=vmem, size = 0x12000, scoped, tag = 'internal scratch']
  %s0 = inlined_call_operand.vmem [shape: f32[2048,64], index: 0, kind: input, shape index: {}]
  %s1 = inlined_call_operand.hbm [shape: f32[2,1,64], index: 1, kind: output, shape index: {0}]
  %s2 = inlined_call_operand.hbm [shape: f32[2,64,64], index: 2, kind: output, shape index: {1}]
  %3 = xla_tuple %s1, %s2
  %s4 = sld [smem:[#allocation0]]
  $region57: #{tpu_custom_call.1} parent=0
    _
  %s6 = ssub.s32 1, %s4
  %s7 = scalar_select 0, %s6, %s4
  $region1: #{tpu_custom_call.1} parent=0
    #allocation2 [shape = 'u8[1024]{0}', space=vmem, size = 0x400, scoped, tag = 'output window, operand 0']
    #allocation3 [shape = 's32[2]{0}', space=sflag, size = 0x8, scoped, tag = 'scoped memory for tpu_custom_call.1']
    #allocation4 [shape = 'u8[65536]{0}', space=vmem, size = 0x10000, scoped, tag = 'output window, operand 1']
    #allocation5 [shape = 's32[2]{0}', space=sflag, size = 0x8, scoped, tag = 'scoped memory for tpu_custom_call.1']
    %8 = vsyncpa [#allocation3], 0
    %s9 = scalar_lea.sflag [#allocation3], 1
    %10 = vsyncpa %s9, 0
    %11 = vsyncpa [#allocation5], 0
    %s12 = scalar_lea.sflag [#allocation5], 1
    %13 = vsyncpa %s12, 0
    loop: start=0, step=1, limit=6
    $region2: #{tpu_custom_call.1} parent=1 // loop_pre_header
      _
    $region3: #{tpu_custom_call.1} parent=1 // loop_header
      %s15 = sphi 0, %s19
      %p16 = scmp.ge.s32.totalorder %s15, 6
      %s22 = sphi 0, %s34
      %s23 = sphi 0, %s30
      %s24 = sphi 0, %s22
      %s25 = sphi 0, %s23
      %s26 = sphi 0, %s24
      %s27 = sphi 0, %s25
      %s45 = sphi 0, %s47
      %s48 = sphi 0, %s45
      %s49 = sphi 0, %s48
      %s65 = sphi 0, %s49
      %s71 = sphi 0, %s73
      %s74 = sphi 0, %s71
      %s75 = sphi 0, %s74
      %s91 = sphi 0, %s75
      %s97 = sphi 0, %s99
      %s100 = sphi 0, %s97
      %s101 = sphi 0, %s100
      %s117 = sphi 0, %s101
    $region4: #{tpu_custom_call.1} parent=1 // loop_header_branch
      %18 = sbr.rel (%p16) target = $region8
    $region5: #{tpu_custom_call.1} parent=1 // loop_body
      %s20 = ssub.s32 %s15, 1
      %s21 = ssub.s32 %s15, 2
      %s28 = sadd.s32 1, %s23
      %p29 = scmp.ge.s32.totalorder %s28, 2
      %s30 = scalar_select %p29, 0, %s28
      %s31 = sadd.s32 1, %s22
      %s32 = scalar_select %p29, %s31, %s22
      %p33 = scmp.ge.s32.totalorder %s32, 2
      %s34 = scalar_select %p33, 0, %s32
      %s35 = smul.u32 %s22, 2
      %s36 = sadd.s32 %s35, %s23
      %p37 = scmp.lt.s32.totalorder %s36, 3
      %s38 = scalar_select %p37, %s36, 3
      %s39 = smul.u32 %s34, 2
      %s40 = sadd.s32 %s39, %s30
      %p41 = scmp.lt.s32.totalorder %s40, 3
      %s42 = scalar_select %p41, %s40, 3
      %s43 = ssub.s32 %s38, %s42
      %p44 = scmp.eq.s32.totalorder %s43, 0
      %s46 = sadd.s32 %s45, 1
      %s47 = scalar_select %p44, %s45, %s46
      %p50 = pneg %p44
      %p51 = scmp.eq.s32.totalorder %s15, 3
      %p52 = por %p50, %p51
      %p53 = scmp.ne.s32.totalorder %s45, %s48
      %p54 = scmp.eq.s32.totalorder %s15, 0
      %p55 = por %p53, %p54
      %p56 = scmp.ne.s32.totalorder %s45, %s48
      %p57 = scmp.eq.s32.totalorder %s20, 3
      %p58 = por %p56, %p57
      %p59 = scmp.ne.s32.totalorder %s48, %s49
      %p60 = scmp.eq.s32.totalorder %s20, 0
      %p61 = por %p59, %p60
      %p62 = scmp.ne.s32.totalorder %s48, %s49
      %p63 = scmp.eq.s32.totalorder %s21, 3
      %p64 = por %p62, %p63
      %p66 = scmp.ne.s32.totalorder %s49, %s65
      %p67 = scmp.eq.s32.totalorder %s21, 0
      %p68 = por %p66, %p67
      %s69 = ssub.s32 %s22, %s34
      %p70 = scmp.eq.s32.totalorder %s69, 0
      %s72 = sadd.s32 %s71, 1
      %s73 = scalar_select %p70, %s71, %s72
      %p76 = pneg %p70
      %p77 = scmp.eq.s32.totalorder %s15, 3
      %p78 = por %p76, %p77
      %p79 = scmp.ne.s32.totalorder %s71, %s74
      %p80 = scmp.eq.s32.totalorder %s15, 0
      %p81 = por %p79, %p80
      %p82 = scmp.ne.s32.totalorder %s71, %s74
      %p83 = scmp.eq.s32.totalorder %s20, 3
      %p84 = por %p82, %p83
      %p85 = scmp.ne.s32.totalorder %s74, %s75
      %p86 = scmp.eq.s32.totalorder %s20, 0
      %p87 = por %p85, %p86
      %p88 = scmp.ne.s32.totalorder %s74, %s75
      %p89 = scmp.eq.s32.totalorder %s21, 3
      %p90 = por %p88, %p89
      %p92 = scmp.ne.s32.totalorder %s75, %s91
      %p93 = scmp.eq.s32.totalorder %s21, 0
      %p94 = por %p92, %p93
      %s95 = ssub.s32 %s22, %s34
      %p96 = scmp.eq.s32.totalorder %s95, 0
      %s98 = sadd.s32 %s97, 1
      %s99 = scalar_select %p96, %s97, %s98
      %p102 = pneg %p96
      %p103 = scmp.eq.s32.totalorder %s15, 3
      %p104 = por %p102, %p103
      %p105 = scmp.ne.s32.totalorder %s97, %s100
      %p106 = scmp.eq.s32.totalorder %s15, 0
      %p107 = por %p105, %p106
      %p108 = scmp.ne.s32.totalorder %s97, %s100
      %p109 = scmp.eq.s32.totalorder %s20, 3
      %p110 = por %p108, %p109
      %p111 = scmp.ne.s32.totalorder %s100, %s101
      %p112 = scmp.eq.s32.totalorder %s20, 0
      %p113 = por %p111, %p112
      %p114 = scmp.ne.s32.totalorder %s100, %s101
      %p115 = scmp.eq.s32.totalorder %s21, 3
      %p116 = por %p114, %p115
      %p118 = scmp.ne.s32.totalorder %s101, %s117
      %p119 = scmp.eq.s32.totalorder %s21, 0
      %p120 = por %p118, %p119
      %p121 = scmp.le.s32.totalorder 1, %s15
      %p122 = scmp.lt.s32.totalorder %s15, 5
      %p123 = pnand %p121, %p122
      %p124 = pneg %p123
      // Predicated region
      $region9: #{tpu_custom_call.1} parent=5 // pred_check
        _
      $region10: #{tpu_custom_call.1} parent=5 // pred_check_branch
        %126 = sbr.rel (%p123) target = $region12
      $region11: #{tpu_custom_call.1} parent=5 // pred_region
        %s127 = ssub.s32 %s15, 1
      $region12: #{tpu_custom_call.1} parent=5 // pred_fallthru
        _
      %p128 = scmp.lt.s32.totalorder %s15, 4
      // Predicated region
      $region13: #{tpu_custom_call.1} parent=5 // pred_check
        %p129 = pneg %p128
      $region14: #{tpu_custom_call.1} parent=5 // pred_check_branch
        %131 = sbr.rel (%p129) target = $region16
      $region15: #{tpu_custom_call.1} parent=5 // pred_region
        // Predicated region
        $region17: #{tpu_custom_call.1} parent=15 // pred_check
          %p132 = pneg %p55
        $region18: #{tpu_custom_call.1} parent=15 // pred_check_branch
          %134 = sbr.rel (%p132) target = $region20
        $region19: #{tpu_custom_call.1} parent=15 // pred_region
          %s135 = smul.u32 %s22, 2
          %s136 = sadd.s32 %s135, %s23
          %p137 = scmp.lt.s32.totalorder %s136, 3
          %s138 = scalar_select %p137, %s136, 3
          %s139 = smul.u32 64, %s138
          %p140 = scmp.lt.s32.totalorder %s139, 255
          %s141 = scalar_select %p140, %s139, 255
          %s142 = smul.addr %s141, 8
          %s143 = scalar_lea.vmem %s0, %s142
          %s144 = smul.u32 %s22, 2
          %s145 = sadd.s32 %s144, %s23
          %p146 = scmp.lt.s32.totalorder %s145, 3
          %s147 = scalar_select %p146, %s145, 3
          %s148 = smul.u32 64, %s147
        $region20: #{tpu_custom_call.1} parent=15 // pred_fallthru
          _
      $region16: #{tpu_custom_call.1} parent=5 // pred_fallthru
        _
      %p149 = scmp.le.s32.totalorder 1, %s15
      %p150 = scmp.lt.s32.totalorder %s15, 5
      %p151 = pnand %p149, %p150
      %p152 = pneg %p151
      // Predicated region
      $region21: #{tpu_custom_call.1} parent=5 // pred_check
        _
      $region22: #{tpu_custom_call.1} parent=5 // pred_check_branch
        %154 = sbr.rel (%p151) target = $region24
      $region23: #{tpu_custom_call.1} parent=5 // pred_region
        %s155 = ssub.s32 %s15, 1
        %s156 = smul.u32 %s24, 2
        %s157 = sadd.s32 %s156, %s25
        %p158 = scmp.lt.s32.totalorder %s157, 3
        %s159 = scalar_select %p158, %s157, 3
        %s160 = smul.u32 64, %s159
        %p161 = scmp.lt.s32.totalorder %s160, 255
        %s162 = scalar_select %p161, %s160, 255
        %s163 = smul.addr %s162, 8
        %s164 = scalar_lea.vmem %s0, %s163
        %p165 = pneg %p61
        %p166 = pneg %p58
        %p167 = pneg %p87
        %p168 = pneg %p84
        %s169 = sand.u32 %s74, 1
        %s170 = scalar_lea.sflag [#allocation3], %s169
        %s171 = sand.u32 %s74, 1
        %s172 = scalar_lea.vmem [#allocation2], %s171
        %p173 = pneg %p113
        %p174 = pneg %p110
        %s175 = sand.u32 %s100, 1
        %s176 = scalar_lea.sflag [#allocation5], %s175
        %s177 = sand.u32 %s100, 1
        %s178 = smul.addr %s177, 64
        %s179 = scalar_lea.vmem [#allocation4], %s178
        %s180 = smul.u32 %s24, 2
        %s181 = sadd.s32 %s180, %s25
        %p182 = scmp.lt.s32.totalorder %s181, 3
        %s183 = scalar_select %p182, %s181, 3
        %s184 = smul.u32 64, %s183
        %p185 = scmp.lt.s32.totalorder %s184, 255
        %s186 = scalar_select %p185, %s184, 255
        %s187 = smul.addr %s186, 8
        %s188 = scalar_lea.vmem %s0, %s187
        %s189 = smul.u32 %s24, 2
        %s190 = sadd.s32 %s189, %s25
        %p191 = scmp.lt.s32.totalorder %s190, 3
        %s192 = scalar_select %p191, %s190, 3
        %s193 = smul.u32 64, %s192
        %p194 = scmp.eq.s32.totalorder %s25, 0
        // Predicated region
        $region25: #{tpu_custom_call.1} parent=23 // pred_check
          %p195 = pneg %p194
        $region26: #{tpu_custom_call.1} parent=23 // pred_check_branch
          %197 = sbr.rel (%p195) target = $region28
        $region27: #{tpu_custom_call.1} parent=23 // pred_region
          %vm198 = vcmask 516096
          %199 = vst.msk [vmem:[%s172] sm:$0x1] %vm198, 0.0
          %vm200 = vcmask 523264
          %201 = vst.msk [vmem:[%s179] sm:$0xff] %vm200, 0.0
          %202 = vst.msk [vmem:[%s179 + $0x8] sm:$0xff] %vm200, 0.0
          %203 = vst.msk [vmem:[%s179 + $0x10] sm:$0xff] %vm200, 0.0
          %204 = vst.msk [vmem:[%s179 + $0x18] sm:$0xff] %vm200, 0.0
          %205 = vst.msk [vmem:[%s179 + $0x20] sm:$0xff] %vm200, 0.0
          %206 = vst.msk [vmem:[%s179 + $0x28] sm:$0xff] %vm200, 0.0
          %207 = vst.msk [vmem:[%s179 + $0x30] sm:$0xff] %vm200, 0.0
          %208 = vst.msk [vmem:[%s179 + $0x38] sm:$0xff] %vm200, 0.0
        $region28: #{tpu_custom_call.1} parent=23 // pred_fallthru
          _
        %v209 = vld [vmem:[%s188] sm:$0xff]
        %v210 = vld [vmem:[%s188 + $0x8] sm:$0xff]
        %v211 = vld [vmem:[%s188 + $0x10] sm:$0xff]
        %v212 = vld [vmem:[%s188 + $0x18] sm:$0xff]
        %v213 = vld [vmem:[%s188 + $0x20] sm:$0xff]
        %v214 = vld [vmem:[%s188 + $0x28] sm:$0xff]
        %v215 = vld [vmem:[%s188 + $0x30] sm:$0xff]
        %v216 = vld [vmem:[%s188 + $0x38] sm:$0xff]
        %v217 = vld [vmem:[%s188 + $0x40] sm:$0xff]
        %v218 = vld [vmem:[%s188 + $0x48] sm:$0xff]
        %v219 = vld [vmem:[%s188 + $0x50] sm:$0xff]
        %v220 = vld [vmem:[%s188 + $0x58] sm:$0xff]
        %v221 = vld [vmem:[%s188 + $0x60] sm:$0xff]
        %v222 = vld [vmem:[%s188 + $0x68] sm:$0xff]
        %v223 = vld [vmem:[%s188 + $0x70] sm:$0xff]
        %v224 = vld [vmem:[%s188 + $0x78] sm:$0xff]
        %v225 = vld [vmem:[%s188 + $0x80] sm:$0xff]
        %v226 = vld [vmem:[%s188 + $0x88] sm:$0xff]
        %v227 = vld [vmem:[%s188 + $0x90] sm:$0xff]
        %v228 = vld [vmem:[%s188 + $0x98] sm:$0xff]
        %v229 = vld [vmem:[%s188 + $0xa0] sm:$0xff]
        %v230 = vld [vmem:[%s188 + $0xa8] sm:$0xff]
        %v231 = vld [vmem:[%s188 + $0xb0] sm:$0xff]
        %v232 = vld [vmem:[%s188 + $0xb8] sm:$0xff]
        %v233 = vld [vmem:[%s188 + $0xc0] sm:$0xff]
        %v234 = vld [vmem:[%s188 + $0xc8] sm:$0xff]
        %v235 = vld [vmem:[%s188 + $0xd0] sm:$0xff]
        %v236 = vld [vmem:[%s188 + $0xd8] sm:$0xff]
        %v237 = vld [vmem:[%s188 + $0xe0] sm:$0xff]
        %v238 = vld [vmem:[%s188 + $0xe8] sm:$0xff]
        %v239 = vld [vmem:[%s188 + $0xf0] sm:$0xff]
        %v240 = vld [vmem:[%s188 + $0xf8] sm:$0xff]
        %v241 = vld [vmem:[%s188 + $0x100] sm:$0xff]
        %v242 = vld [vmem:[%s188 + $0x108] sm:$0xff]
        %v243 = vld [vmem:[%s188 + $0x110] sm:$0xff]
        %v244 = vld [vmem:[%s188 + $0x118] sm:$0xff]
        %v245 = vld [vmem:[%s188 + $0x120] sm:$0xff]
        %v246 = vld [vmem:[%s188 + $0x128] sm:$0xff]
        %v247 = vld [vmem:[%s188 + $0x130] sm:$0xff]
        %v248 = vld [vmem:[%s188 + $0x138] sm:$0xff]
        %v249 = vld [vmem:[%s188 + $0x140] sm:$0xff]
        %v250 = vld [vmem:[%s188 + $0x148] sm:$0xff]
        %v251 = vld [vmem:[%s188 + $0x150] sm:$0xff]
        %v252 = vld [vmem:[%s188 + $0x158] sm:$0xff]
        %v253 = vld [vmem:[%s188 + $0x160] sm:$0xff]
        %v254 = vld [vmem:[%s188 + $0x168] sm:$0xff]
        %v255 = vld [vmem:[%s188 + $0x170] sm:$0xff]
        %v256 = vld [vmem:[%s188 + $0x178] sm:$0xff]
        %v257 = vld [vmem:[%s188 + $0x180] sm:$0xff]
        %v258 = vld [vmem:[%s188 + $0x188] sm:$0xff]
        %v259 = vld [vmem:[%s188 + $0x190] sm:$0xff]
        %v260 = vld [vmem:[%s188 + $0x198] sm:$0xff]
        %v261 = vld [vmem:[%s188 + $0x1a0] sm:$0xff]
        %v262 = vld [vmem:[%s188 + $0x1a8] sm:$0xff]
        %v263 = vld [vmem:[%s188 + $0x1b0] sm:$0xff]
        %v264 = vld [vmem:[%s188 + $0x1b8] sm:$0xff]
        %v265 = vld [vmem:[%s188 + $0x1c0] sm:$0xff]
        %v266 = vld [vmem:[%s188 + $0x1c8] sm:$0xff]
        %v267 = vld [vmem:[%s188 + $0x1d0] sm:$0xff]
        %v268 = vld [vmem:[%s188 + $0x1d8] sm:$0xff]
        %v269 = vld [vmem:[%s188 + $0x1e0] sm:$0xff]
        %v270 = vld [vmem:[%s188 + $0x1e8] sm:$0xff]
        %v271 = vld [vmem:[%s188 + $0x1f0] sm:$0xff]
        %v272 = vld [vmem:[%s188 + $0x1f8] sm:$0xff]
        %s273 = smul.u32 %s24, 2
        %s274 = sadd.s32 %s273, %s25
        %s275 = smul.u32 %s274, 512
        %s276 = ssub.s32 2048, %s275
        %p277 = scmp.ge.s32.totalorder %s276, 512
        // Predicated region
        $region29: #{tpu_custom_call.1} parent=23 // pred_check
          %p278 = pneg %p277
        $region30: #{tpu_custom_call.1} parent=23 // pred_check_branch
          %280 = sbr.rel (%p278) target = $region32
        $region31: #{tpu_custom_call.1} parent=23 // pred_region
          %281 = vmatprep.subr.mxu0 0.0
          %282 = vmatpush1.msra.mxu0 %v209
          %283 = vmatprep.subr.mxu0 0.0
          %284 = vmatpush1.msra.mxu0 %v210
          %285 = vmatprep.subr.mxu0 0.0
          %286 = vmatpush1.msra.mxu0 %v211
          %287 = vmatprep.subr.mxu0 0.0
          %288 = vmatpush1.msra.mxu0 %v212
          %289 = vmatprep.subr.mxu0 0.0
          %290 = vmatpush1.msra.mxu0 %v213
          %291 = vmatprep.subr.mxu0 0.0
          %292 = vmatpush1.msra.mxu0 %v214
          %293 = vmatprep.subr.mxu0 0.0
          %294 = vmatpush1.msra.mxu0 %v215
          %295 = vmatprep.subr.mxu0 0.0
          %296 = vmatpush1.msra.mxu0 %v216
          %297 = vmatprep.subr.mxu0 0.0
          %298 = vmatpush1.msra.mxu0 %v217
          %299 = vmatprep.subr.mxu0 0.0
          %300 = vmatpush1.msra.mxu0 %v218
          %301 = vmatprep.subr.mxu0 0.0
          %302 = vmatpush1.msra.mxu0 %v219
          %303 = vmatprep.subr.mxu0 0.0
          %304 = vmatpush1.msra.mxu0 %v220
          %305 = vmatprep.subr.mxu0 0.0
          %306 = vmatpush1.msra.mxu0 %v221
          %307 = vmatprep.subr.mxu0 0.0
          %308 = vmatpush1.msra.mxu0 %v222
          %309 = vmatprep.subr.mxu0 0.0
          %310 = vmatpush1.msra.mxu0 %v223
          %311 = vmatprep.subr.mxu0 0.0
          %312 = vmatpush1.msra.mxu0 %v224
          %313 = vmatprep.subr.mxu0 0.0
          %314 = vmatpush1.msra.mxu0 %v225
          %315 = vmatprep.subr.mxu0 0.0
          %316 = vmatpush1.msra.mxu0 %v226
          %317 = vmatprep.subr.mxu0 0.0
          %318 = vmatpush1.msra.mxu0 %v227
          %319 = vmatprep.subr.mxu0 0.0
          %320 = vmatpush1.msra.mxu0 %v228
          %321 = vmatprep.subr.mxu0 0.0
          %322 = vmatpush1.msra.mxu0 %v229
          %323 = vmatprep.subr.mxu0 0.0
          %324 = vmatpush1.msra.mxu0 %v230
          %325 = vmatprep.subr.mxu0 0.0
          %326 = vmatpush1.msra.mxu0 %v231
          %327 = vmatprep.subr.mxu0 0.0
          %328 = vmatpush1.msra.mxu0 %v232
          %329 = vmatprep.subr.mxu0 0.0
          %330 = vmatpush1.msra.mxu0 %v233
          %331 = vmatprep.subr.mxu0 0.0
          %332 = vmatpush1.msra.mxu0 %v234
          %333 = vmatprep.subr.mxu0 0.0
          %334 = vmatpush1.msra.mxu0 %v235
          %335 = vmatprep.subr.mxu0 0.0
          %336 = vmatpush1.msra.mxu0 %v236
          %337 = vmatprep.subr.mxu0 0.0
          %338 = vmatpush1.msra.mxu0 %v237
          %339 = vmatprep.subr.mxu0 0.0
          %340 = vmatpush1.msra.mxu0 %v238
          %341 = vmatprep.subr.mxu0 0.0
          %342 = vmatpush1.msra.mxu0 %v239
          %343 = vmatprep.subr.mxu0 0.0
          %344 = vmatpush1.msra.mxu0 %v240
          %345 = vmatprep.mubr.f32.mxu0 1.0
          %346 = vmatmul.mubr.f32.gmra.mrb[0].mxu0 1.0
          %v347 = vpop.f32.mrb[0].mxu0
          %v348 = vadd.f32 0.0, %v347
          %v349 = vpop.f32.mrb[0].mxu0
          %350 = vdwg.mxu0
          %351 = vmatprep.subr.mxu0 0.0
          %352 = vmatpush1.msra.mxu0 %v241
          %353 = vmatprep.subr.mxu0 0.0
          %354 = vmatpush1.msra.mxu0 %v242
          %355 = vmatprep.subr.mxu0 0.0
          %356 = vmatpush1.msra.mxu0 %v243
          %357 = vmatprep.subr.mxu0 0.0
          %358 = vmatpush1.msra.mxu0 %v244
          %359 = vmatprep.subr.mxu0 0.0
          %360 = vmatpush1.msra.mxu0 %v245
          %361 = vmatprep.subr.mxu0 0.0
          %362 = vmatpush1.msra.mxu0 %v246
          %363 = vmatprep.subr.mxu0 0.0
          %364 = vmatpush1.msra.mxu0 %v247
          %365 = vmatprep.subr.mxu0 0.0
          %366 = vmatpush1.msra.mxu0 %v248
          %367 = vmatprep.subr.mxu0 0.0
          %368 = vmatpush1.msra.mxu0 %v249
          %369 = vmatprep.subr.mxu0 0.0
          %370 = vmatpush1.msra.mxu0 %v250
          %371 = vmatprep.subr.mxu0 0.0
          %372 = vmatpush1.msra.mxu0 %v251
          %373 = vmatprep.subr.mxu0 0.0
          %374 = vmatpush1.msra.mxu0 %v252
          %375 = vmatprep.subr.mxu0 0.0
          %376 = vmatpush1.msra.mxu0 %v253
          %377 = vmatprep.subr.mxu0 0.0
          %378 = vmatpush1.msra.mxu0 %v254
          %379 = vmatprep.subr.mxu0 0.0
          %380 = vmatpush1.msra.mxu0 %v255
          %381 = vmatprep.subr.mxu0 0.0
          %382 = vmatpush1.msra.mxu0 %v256
          %383 = vmatprep.subr.mxu0 0.0
          %384 = vmatpush1.msra.mxu0 %v257
          %385 = vmatprep.subr.mxu0 0.0
          %386 = vmatpush1.msra.mxu0 %v258
          %387 = vmatprep.subr.mxu0 0.0
          %388 = vmatpush1.msra.mxu0 %v259
          %389 = vmatprep.subr.mxu0 0.0
          %390 = vmatpush1.msra.mxu0 %v260
          %391 = vmatprep.subr.mxu0 0.0
          %392 = vmatpush1.msra.mxu0 %v261
          %393 = vmatprep.subr.mxu0 0.0
          %394 = vmatpush1.msra.mxu0 %v262
          %395 = vmatprep.subr.mxu0 0.0
          %396 = vmatpush1.msra.mxu0 %v263
          %397 = vmatprep.subr.mxu0 0.0
          %398 = vmatpush1.msra.mxu0 %v264
          %399 = vmatprep.subr.mxu0 0.0
          %400 = vmatpush1.msra.mxu0 %v265
          %401 = vmatprep.subr.mxu0 0.0
          %402 = vmatpush1.msra.mxu0 %v266
          %403 = vmatprep.subr.mxu0 0.0
          %404 = vmatpush1.msra.mxu0 %v267
          %405 = vmatprep.subr.mxu0 0.0
          %406 = vmatpush1.msra.mxu0 %v268
          %407 = vmatprep.subr.mxu0 0.0
          %408 = vmatpush1.msra.mxu0 %v269
          %409 = vmatprep.subr.mxu0 0.0
          %410 = vmatpush1.msra.mxu0 %v270
          %411 = vmatprep.subr.mxu0 0.0
          %412 = vmatpush1.msra.mxu0 %v271
          %413 = vmatprep.subr.mxu0 0.0
          %414 = vmatpush1.msra.mxu0 %v272
          %415 = vmatprep.mubr.f32.mxu0 1.0
          %416 = vmatmul.mubr.f32.gmra.mrb[0].mxu0 1.0
          %v417 = vpop.f32.mrb[0].mxu0
          %v418 = vadd.f32 %v348, %v417
          %v419 = vpop.f32.mrb[0].mxu0
          %420 = vdwg.mxu0
          %421 = vxpose.xlu0.b32.start [1/16] %v209, 128
          %422 = vxpose.xlu0.b32.cont [2/16] %v210, 128
          %423 = vxpose.xlu0.b32.cont [3/16] %v211, 128
          %424 = vxpose.xlu0.b32.cont [4/16] %v212, 128
          %425 = vxpose.xlu0.b32.cont [5/16] %v213, 128
          %426 = vxpose.xlu0.b32.cont [6/16] %v214, 128
          %427 = vxpose.xlu0.b32.cont [7/16] %v215, 128
          %428 = vxpose.xlu0.b32.cont [8/16] %v216, 128
          %429 = vxpose.xlu0.b32.cont [9/16] %v217, 128
          %430 = vxpose.xlu0.b32.cont [10/16] %v218, 128
          %431 = vxpose.xlu0.b32.cont [11/16] %v219, 128
          %432 = vxpose.xlu0.b32.cont [12/16] %v220, 128
          %433 = vxpose.xlu0.b32.cont [13/16] %v221, 128
          %434 = vxpose.xlu0.b32.cont [14/16] %v222, 128
          %435 = vxpose.xlu0.b32.cont [15/16] %v223, 128
          %436 = vxpose.xlu0.b32.end [16/16] %v224, 128
          %v437 = vpop.trf.xlu0
          %v438 = vpop.trf.xlu0
          %v439 = vpop.trf.xlu0
          %v440 = vpop.trf.xlu0
          %v441 = vpop.trf.xlu0
          %v442 = vpop.trf.xlu0
          %v443 = vpop.trf.xlu0
          %v444 = vpop.trf.xlu0
          %v445 = vpop.trf.xlu0
          %v446 = vpop.trf.xlu0
          %v447 = vpop.trf.xlu0
          %v448 = vpop.trf.xlu0
          %v449 = vpop.trf.xlu0
          %v450 = vpop.trf.xlu0
          %v451 = vpop.trf.xlu0
          %v452 = vpop.trf.xlu0
          %453 = vxpose.xlu0.b32.start [1/16] %v225, 128
          %454 = vxpose.xlu0.b32.cont [2/16] %v226, 128
          %455 = vxpose.xlu0.b32.cont [3/16] %v227, 128
          %456 = vxpose.xlu0.b32.cont [4/16] %v228, 128
          %457 = vxpose.xlu0.b32.cont [5/16] %v229, 128
          %458 = vxpose.xlu0.b32.cont [6/16] %v230, 128
          %459 = vxpose.xlu0.b32.cont [7/16] %v231, 128
          %460 = vxpose.xlu0.b32.cont [8/16] %v232, 128
          %461 = vxpose.xlu0.b32.cont [9/16] %v233, 128
          %462 = vxpose.xlu0.b32.cont [10/16] %v234, 128
          %463 = vxpose.xlu0.b32.cont [11/16] %v235, 128
          %464 = vxpose.xlu0.b32.cont [12/16] %v236, 128
          %465 = vxpose.xlu0.b32.cont [13/16] %v237, 128
          %466 = vxpose.xlu0.b32.cont [14/16] %v238, 128
          %467 = vxpose.xlu0.b32.cont [15/16] %v239, 128
          %468 = vxpose.xlu0.b32.end [16/16] %v240, 128
          %v469 = vpop.trf.xlu0
          %v470 = vpop.trf.xlu0
          %v471 = vpop.trf.xlu0
          %v472 = vpop.trf.xlu0
          %v473 = vpop.trf.xlu0
          %v474 = vpop.trf.xlu0
          %v475 = vpop.trf.xlu0
          %v476 = vpop.trf.xlu0
          %v477 = vpop.trf.xlu0
          %v478 = vpop.trf.xlu0
          %v479 = vpop.trf.xlu0
          %v480 = vpop.trf.xlu0
          %v481 = vpop.trf.xlu0
          %v482 = vpop.trf.xlu0
          %v483 = vpop.trf.xlu0
          %v484 = vpop.trf.xlu0
          %485 = vxpose.xlu0.b32.start [1/16] %v241, 128
          %486 = vxpose.xlu0.b32.cont [2/16] %v242, 128
          %487 = vxpose.xlu0.b32.cont [3/16] %v243, 128
          %488 = vxpose.xlu0.b32.cont [4/16] %v244, 128
          %489 = vxpose.xlu0.b32.cont [5/16] %v245, 128
          %490 = vxpose.xlu0.b32.cont [6/16] %v246, 128
          %491 = vxpose.xlu0.b32.cont [7/16] %v247, 128
          %492 = vxpose.xlu0.b32.cont [8/16] %v248, 128
          %493 = vxpose.xlu0.b32.cont [9/16] %v249, 128
          %494 = vxpose.xlu0.b32.cont [10/16] %v250, 128
          %495 = vxpose.xlu0.b32.cont [11/16] %v251, 128
          %496 = vxpose.xlu0.b32.cont [12/16] %v252, 128
          %497 = vxpose.xlu0.b32.cont [13/16] %v253, 128
          %498 = vxpose.xlu0.b32.cont [14/16] %v254, 128
          %499 = vxpose.xlu0.b32.cont [15/16] %v255, 128
          %500 = vxpose.xlu0.b32.end [16/16] %v256, 128
          %v501 = vpop.trf.xlu0
          %v502 = vpop.trf.xlu0
          %v503 = vpop.trf.xlu0
          %v504 = vpop.trf.xlu0
          %v505 = vpop.trf.xlu0
          %v506 = vpop.trf.xlu0
          %v507 = vpop.trf.xlu0
          %v508 = vpop.trf.xlu0
          %v509 = vpop.trf.xlu0
          %v510 = vpop.trf.xlu0
          %v511 = vpop.trf.xlu0
          %v512 = vpop.trf.xlu0
          %v513 = vpop.trf.xlu0
          %v514 = vpop.trf.xlu0
          %v515 = vpop.trf.xlu0
          %v516 = vpop.trf.xlu0
          %517 = vxpose.xlu0.b32.start [1/16] %v257, 128
          %518 = vxpose.xlu0.b32.cont [2/16] %v258, 128
          %519 = vxpose.xlu0.b32.cont [3/16] %v259, 128
          %520 = vxpose.xlu0.b32.cont [4/16] %v260, 128
          %521 = vxpose.xlu0.b32.cont [5/16] %v261, 128
          %522 = vxpose.xlu0.b32.cont [6/16] %v262, 128
          %523 = vxpose.xlu0.b32.cont [7/16] %v263, 128
          %524 = vxpose.xlu0.b32.cont [8/16] %v264, 128
          %525 = vxpose.xlu0.b32.cont [9/16] %v265, 128
          %526 = vxpose.xlu0.b32.cont [10/16] %v266, 128
          %527 = vxpose.xlu0.b32.cont [11/16] %v267, 128
          %528 = vxpose.xlu0.b32.cont [12/16] %v268, 128
          %529 = vxpose.xlu0.b32.cont [13/16] %v269, 128
          %530 = vxpose.xlu0.b32.cont [14/16] %v270, 128
          %531 = vxpose.xlu0.b32.cont [15/16] %v271, 128
          %532 = vxpose.xlu0.b32.end [16/16] %v272, 128
          %v533 = vpop.trf.xlu0
          %v534 = vpop.trf.xlu0
          %v535 = vpop.trf.xlu0
          %v536 = vpop.trf.xlu0
          %v537 = vpop.trf.xlu0
          %v538 = vpop.trf.xlu0
          %v539 = vpop.trf.xlu0
          %v540 = vpop.trf.xlu0
          %v541 = vpop.trf.xlu0
          %v542 = vpop.trf.xlu0
          %v543 = vpop.trf.xlu0
          %v544 = vpop.trf.xlu0
          %v545 = vpop.trf.xlu0
          %v546 = vpop.trf.xlu0
          %v547 = vpop.trf.xlu0
          %v548 = vpop.trf.xlu0
          %549 = vmatprep.subr.mxu0 0.0
          %550 = vmatpush1.msra.mxu0 %v209
          %551 = vmatprep.subr.mxu0 0.0
          %552 = vmatpush1.msra.mxu0 %v210
          %553 = vmatprep.subr.mxu0 0.0
          %554 = vmatpush1.msra.mxu0 %v211
          %555 = vmatprep.subr.mxu0 0.0
          %556 = vmatpush1.msra.mxu0 %v212
          %557 = vmatprep.subr.mxu0 0.0
          %558 = vmatpush1.msra.mxu0 %v213
          %559 = vmatprep.subr.mxu0 0.0
          %560 = vmatpush1.msra.mxu0 %v214
          %561 = vmatprep.subr.mxu0 0.0
          %562 = vmatpush1.msra.mxu0 %v215
          %563 = vmatprep.subr.mxu0 0.0
          %564 = vmatpush1.msra.mxu0 %v216
          %565 = vmatprep.subr.mxu0 0.0
          %566 = vmatpush1.msra.mxu0 %v217
          %567 = vmatprep.subr.mxu0 0.0
          %568 = vmatpush1.msra.mxu0 %v218
          %569 = vmatprep.subr.mxu0 0.0
          %570 = vmatpush1.msra.mxu0 %v219
          %571 = vmatprep.subr.mxu0 0.0
          %572 = vmatpush1.msra.mxu0 %v220
          %573 = vmatprep.subr.mxu0 0.0
          %574 = vmatpush1.msra.mxu0 %v221
          %575 = vmatprep.subr.mxu0 0.0
          %576 = vmatpush1.msra.mxu0 %v222
          %577 = vmatprep.subr.mxu0 0.0
          %578 = vmatpush1.msra.mxu0 %v223
          %579 = vmatprep.subr.mxu0 0.0
          %580 = vmatpush1.msra.mxu0 %v224
          %581 = vmatprep.subr.mxu0 0.0
          %582 = vmatpush1.msra.mxu0 %v225
          %583 = vmatprep.subr.mxu0 0.0
          %584 = vmatpush1.msra.mxu0 %v226
          %585 = vmatprep.subr.mxu0 0.0
          %586 = vmatpush1.msra.mxu0 %v227
          %587 = vmatprep.subr.mxu0 0.0
          %588 = vmatpush1.msra.mxu0 %v228
          %589 = vmatprep.subr.mxu0 0.0
          %590 = vmatpush1.msra.mxu0 %v229
          %591 = vmatprep.subr.mxu0 0.0
          %592 = vmatpush1.msra.mxu0 %v230
          %593 = vmatprep.subr.mxu0 0.0
          %594 = vmatpush1.msra.mxu0 %v231
          %595 = vmatprep.subr.mxu0 0.0
          %596 = vmatpush1.msra.mxu0 %v232
          %597 = vmatprep.subr.mxu0 0.0
          %598 = vmatpush1.msra.mxu0 %v233
          %599 = vmatprep.subr.mxu0 0.0
          %600 = vmatpush1.msra.mxu0 %v234
          %601 = vmatprep.subr.mxu0 0.0
          %602 = vmatpush1.msra.mxu0 %v235
          %603 = vmatprep.subr.mxu0 0.0
          %604 = vmatpush1.msra.mxu0 %v236
          %605 = vmatprep.subr.mxu0 0.0
          %606 = vmatpush1.msra.mxu0 %v237
          %607 = vmatprep.subr.mxu0 0.0
          %608 = vmatpush1.msra.mxu0 %v238
          %609 = vmatprep.subr.mxu0 0.0
          %610 = vmatpush1.msra.mxu0 %v239
          %611 = vmatprep.subr.mxu0 0.0
          %612 = vmatpush1.msra.mxu0 %v240
          %613 = vmatprep.mubr.f32.mxu0 %v469
          %614 = vmatmul.mubr.f32.gmra.mrb[0].mxu0 %v437
          %v615 = vpop.f32.mrb[0].mxu0
          %v616 = vadd.f32 0.0, %v615
          %v617 = vpop.f32.mrb[0].mxu0
          %618 = vmatprep.mubr.f32.mxu0 %v470
          %619 = vmatmul.mubr.f32.gmra.mrb[0].mxu0 %v438
          %v620 = vpop.f32.mrb[0].mxu0
          %v621 = vadd.f32 0.0, %v620
          %v622 = vpop.f32.mrb[0].mxu0
          %623 = vmatprep.mubr.f32.mxu0 %v471
          %624 = vmatmul.mubr.f32.gmra.mrb[0].mxu0 %v439
          %v625 = vpop.f32.mrb[0].mxu0
          %v626 = vadd.f32 0.0, %v625
          %v627 = vpop.f32.mrb[0].mxu0
          %628 = vmatprep.mubr.f32.mxu0 %v472
          %629 = vmatmul.mubr.f32.gmra.mrb[0].mxu0 %v440
          %v630 = vpop.f32.mrb[0].mxu0
          %v631 = vadd.f32 0.0, %v630
          %v632 = vpop.f32.mrb[0].mxu0
          %633 = vmatprep.mubr.f32.mxu0 %v473
          %634 = vmatmul.mubr.f32.gmra.mrb[0].mxu0 %v441
          %v635 = vpop.f32.mrb[0].mxu0
          %v636 = vadd.f32 0.0, %v635
          %v637 = vpop.f32.mrb[0].mxu0
          %638 = vmatprep.mubr.f32.mxu0 %v474
          %639 = vmatmul.mubr.f32.gmra.mrb[0].mxu0 %v442
          %v640 = vpop.f32.mrb[0].mxu0
          %v641 = vadd.f32 0.0, %v640
          %v642 = vpop.f32.mrb[0].mxu0
          %643 = vmatprep.mubr.f32.mxu0 %v475
          %644 = vmatmul.mubr.f32.gmra.mrb[0].mxu0 %v443
          %v645 = vpop.f32.mrb[0].mxu0
          %v646 = vadd.f32 0.0, %v645
          %v647 = vpop.f32.mrb[0].mxu0
          %648 = vmatprep.mubr.f32.mxu0 %v476
          %649 = vmatmul.mubr.f32.gmra.mrb[0].mxu0 %v444
          %v650 = vpop.f32.mrb[0].mxu0
          %v651 = vadd.f32 0.0, %v650
          %v652 = vpop.f32.mrb[0].mxu0
          %653 = vdwg.mxu0
          %654 = vmatprep.subr.mxu0 0.0
          %655 = vmatpush1.msra.mxu0 %v241
          %656 = vmatprep.subr.mxu0 0.0
          %657 = vmatpush1.msra.mxu0 %v242
          %658 = vmatprep.subr.mxu0 0.0
          %659 = vmatpush1.msra.mxu0 %v243
          %660 = vmatprep.subr.mxu0 0.0
          %661 = vmatpush1.msra.mxu0 %v244
          %662 = vmatprep.subr.mxu0 0.0
          %663 = vmatpush1.msra.mxu0 %v245
          %664 = vmatprep.subr.mxu0 0.0
          %665 = vmatpush1.msra.mxu0 %v246
          %666 = vmatprep.subr.mxu0 0.0
          %667 = vmatpush1.msra.mxu0 %v247
          %668 = vmatprep.subr.mxu0 0.0
          %669 = vmatpush1.msra.mxu0 %v248
          %670 = vmatprep.subr.mxu0 0.0
          %671 = vmatpush1.msra.mxu0 %v249
          %672 = vmatprep.subr.mxu0 0.0
          %673 = vmatpush1.msra.mxu0 %v250
          %674 = vmatprep.subr.mxu0 0.0
          %675 = vmatpush1.msra.mxu0 %v251
          %676 = vmatprep.subr.mxu0 0.0
          %677 = vmatpush1.msra.mxu0 %v252
          %678 = vmatprep.subr.mxu0 0.0
          %679 = vmatpush1.msra.mxu0 %v253
          %680 = vmatprep.subr.mxu0 0.0
          %681 = vmatpush1.msra.mxu0 %v254
          %682 = vmatprep.subr.mxu0 0.0
          %683 = vmatpush1.msra.mxu0 %v255
          %684 = vmatprep.subr.mxu0 0.0
          %685 = vmatpush1.msra.mxu0 %v256
          %686 = vmatprep.subr.mxu0 0.0
          %687 = vmatpush1.msra.mxu0 %v257
          %688 = vmatprep.subr.mxu0 0.0
          %689 = vmatpush1.msra.mxu0 %v258
          %690 = vmatprep.subr.mxu0 0.0
          %691 = vmatpush1.msra.mxu0 %v259
          %692 = vmatprep.subr.mxu0 0.0
          %693 = vmatpush1.msra.mxu0 %v260
          %694 = vmatprep.subr.mxu0 0.0
          %695 = vmatpush1.msra.mxu0 %v261
          %696 = vmatprep.subr.mxu0 0.0
          %697 = vmatpush1.msra.mxu0 %v262
          %698 = vmatprep.subr.mxu0 0.0
          %699 = vmatpush1.msra.mxu0 %v263
          %700 = vmatprep.subr.mxu0 0.0
          %701 = vmatpush1.msra.mxu0 %v264
          %702 = vmatprep.subr.mxu0 0.0
          %703 = vmatpush1.msra.mxu0 %v265
          %704 = vmatprep.subr.mxu0 0.0
          %705 = vmatpush1.msra.mxu0 %v266
          %706 = vmatprep.subr.mxu0 0.0
          %707 = vmatpush1.msra.mxu0 %v267
          %708 = vmatprep.subr.mxu0 0.0
          %709 = vmatpush1.msra.mxu0 %v268
          %710 = vmatprep.subr.mxu0 0.0
          %711 = vmatpush1.msra.mxu0 %v269
          %712 = vmatprep.subr.mxu0 0.0
          %713 = vmatpush1.msra.mxu0 %v270
          %714 = vmatprep.subr.mxu0 0.0
          %715 = vmatpush1.msra.mxu0 %v271
          %716 = vmatprep.subr.mxu0 0.0
          %717 = vmatpush1.msra.mxu0 %v272
          %718 = vmatprep.mubr.f32.mxu0 %v533
          %719 = vmatmul.mubr.f32.gmra.mrb[0].mxu0 %v501
          %v720 = vpop.f32.mrb[0].mxu0
          %v721 = vadd.f32 %v616, %v720
          %v722 = vpop.f32.mrb[0].mxu0
          %723 = vmatprep.mubr.f32.mxu0 %v534
          %724 = vmatmul.mubr.f32.gmra.mrb[0].mxu0 %v502
          %v725 = vpop.f32.mrb[0].mxu0
          %v726 = vadd.f32 %v621, %v725
          %v727 = vpop.f32.mrb[0].mxu0
          %728 = vmatprep.mubr.f32.mxu0 %v535
          %729 = vmatmul.mubr.f32.gmra.mrb[0].mxu0 %v503
          %v730 = vpop.f32.mrb[0].mxu0
          %v731 = vadd.f32 %v626, %v730
          %v732 = vpop.f32.mrb[0].mxu0
          %733 = vmatprep.mubr.f32.mxu0 %v536
          %734 = vmatmul.mubr.f32.gmra.mrb[0].mxu0 %v504
          %v735 = vpop.f32.mrb[0].mxu0
          %v736 = vadd.f32 %v631, %v735
          %v737 = vpop.f32.mrb[0].mxu0
          %738 = vmatprep.mubr.f32.mxu0 %v537
          %739 = vmatmul.mubr.f32.gmra.mrb[0].mxu0 %v505
          %v740 = vpop.f32.mrb[0].mxu0
          %v741 = vadd.f32 %v636, %v740
          %v742 = vpop.f32.mrb[0].mxu0
          %743 = vmatprep.mubr.f32.mxu0 %v538
          %744 = vmatmul.mubr.f32.gmra.mrb[0].mxu0 %v506
          %v745 = vpop.f32.mrb[0].mxu0
          %v746 = vadd.f32 %v641, %v745
          %v747 = vpop.f32.mrb[0].mxu0
          %748 = vmatprep.mubr.f32.mxu0 %v539
          %749 = vmatmul.mubr.f32.gmra.mrb[0].mxu0 %v507
          %v750 = vpop.f32.mrb[0].mxu0
          %v751 = vadd.f32 %v646, %v750
          %v752 = vpop.f32.mrb[0].mxu0
          %753 = vmatprep.mubr.f32.mxu0 %v540
          %754 = vmatmul.mubr.f32.gmra.mrb[0].mxu0 %v508
          %v755 = vpop.f32.mrb[0].mxu0
          %v756 = vadd.f32 %v651, %v755
          %v757 = vpop.f32.mrb[0].mxu0
          %758 = vdwg.mxu0
          %v759 = vld [vmem:[%s172] sm:$0x1]
          %v760 = vadd.f32 %v759, %v418
          %vm761 = vcmask 516096
          %762 = vst.msk [vmem:[%s172] sm:$0x1] %vm761, %v760
          %v763 = vld [vmem:[%s179] sm:$0xff]
          %v764 = vld [vmem:[%s179 + $0x8] sm:$0xff]
          %v765 = vld [vmem:[%s179 + $0x10] sm:$0xff]
          %v766 = vld [vmem:[%s179 + $0x18] sm:$0xff]
          %v767 = vld [vmem:[%s179 + $0x20] sm:$0xff]
          %v768 = vld [vmem:[%s179 + $0x28] sm:$0xff]
          %v769 = vld [vmem:[%s179 + $0x30] sm:$0xff]
          %v770 = vld [vmem:[%s179 + $0x38] sm:$0xff]
          %v771 = vadd.f32 %v763, %v721
          %v772 = vadd.f32 %v764, %v726
          %v773 = vadd.f32 %v765, %v731
          %v774 = vadd.f32 %v766, %v736
          %v775 = vadd.f32 %v767, %v741
          %v776 = vadd.f32 %v768, %v746
          %v777 = vadd.f32 %v769, %v751
          %v778 = vadd.f32 %v770, %v756
          %vm779 = vcmask 523264
          %780 = vst.msk [vmem:[%s179] sm:$0xff] %vm779, %v771
          %781 = vst.msk [vmem:[%s179 + $0x8] sm:$0xff] %vm779, %v772
          %782 = vst.msk [vmem:[%s179 + $0x10] sm:$0xff] %vm779, %v773
          %783 = vst.msk [vmem:[%s179 + $0x18] sm:$0xff] %vm779, %v774
          %784 = vst.msk [vmem:[%s179 + $0x20] sm:$0xff] %vm779, %v775
          %785 = vst.msk [vmem:[%s179 + $0x28] sm:$0xff] %vm779, %v776
          %786 = vst.msk [vmem:[%s179 + $0x30] sm:$0xff] %vm779, %v777
          %787 = vst.msk [vmem:[%s179 + $0x38] sm:$0xff] %vm779, %v778
        $region32: #{tpu_custom_call.1} parent=23 // pred_fallthru
          _
        %p788 = scmp.lt.s32.totalorder %s276, 512
        // Predicated region
        $region33: #{tpu_custom_call.1} parent=23 // pred_check
          %p789 = pneg %p788
        $region34: #{tpu_custom_call.1} parent=23 // pred_check_branch
          %791 = sbr.rel (%p789) target = $region36
        $region35: #{tpu_custom_call.1} parent=23 // pred_region
          %v792 = vlaneseq
          %v793 = vshrl.u32 %v792, 7
          %v794 = vadd.s32 %v793, 8
          %v795 = vadd.s32 %v793, 16
          %v796 = vadd.s32 %v793, 24
          %v797 = vadd.s32 %v793, 32
          %v798 = vadd.s32 %v793, 40
          %v799 = vadd.s32 %v793, 48
          %v800 = vadd.s32 %v793, 56
          %v801 = vadd.s32 %v793, 64
          %v802 = vadd.s32 %v793, 72
          %v803 = vadd.s32 %v793, 80
          %v804 = vadd.s32 %v793, 88
          %v805 = vadd.s32 %v793, 96
          %v806 = vadd.s32 %v793, 104
          %v807 = vadd.s32 %v793, 112
          %v808 = vadd.s32 %v793, 120
          %v809 = vadd.s32 %v793, 128
          %v810 = vadd.s32 %v793, 136
          %v811 = vadd.s32 %v793, 144
          %v812 = vadd.s32 %v793, 152
          %v813 = vadd.s32 %v793, 160
          %v814 = vadd.s32 %v793, 168
          %v815 = vadd.s32 %v793, 176
          %v816 = vadd.s32 %v793, 184
          %v817 = vadd.s32 %v793, 192
          %v818 = vadd.s32 %v793, 200
          %v819 = vadd.s32 %v793, 208
          %v820 = vadd.s32 %v793, 216
          %v821 = vadd.s32 %v793, 224
          %v822 = vadd.s32 %v793, 232
          %v823 = vadd.s32 %v793, 240
          %v824 = vadd.s32 %v793, 248
          %v825 = vadd.s32 %v793, 256
          %v826 = vadd.s32 %v793, 264
          %v827 = vadd.s32 %v793, 272
          %v828 = vadd.s32 %v793, 280
          %v829 = vadd.s32 %v793, 288
          %v830 = vadd.s32 %v793, 296
          %v831 = vadd.s32 %v793, 304
          %v832 = vadd.s32 %v793, 312
          %v833 = vadd.s32 %v793, 320
          %v834 = vadd.s32 %v793, 328
          %v835 = vadd.s32 %v793, 336
          %v836 = vadd.s32 %v793, 344
          %v837 = vadd.s32 %v793, 352
          %v838 = vadd.s32 %v793, 360
          %v839 = vadd.s32 %v793, 368
          %v840 = vadd.s32 %v793, 376
          %v841 = vadd.s32 %v793, 384
          %v842 = vadd.s32 %v793, 392
          %v843 = vadd.s32 %v793, 400
          %v844 = vadd.s32 %v793, 408
          %v845 = vadd.s32 %v793, 416
          %v846 = vadd.s32 %v793, 424
          %v847 = vadd.s32 %v793, 432
          %v848 = vadd.s32 %v793, 440
          %v849 = vadd.s32 %v793, 448
          %v850 = vadd.s32 %v793, 456
          %v851 = vadd.s32 %v793, 464
          %v852 = vadd.s32 %v793, 472
          %v853 = vadd.s32 %v793, 480
          %v854 = vadd.s32 %v793, 488
          %v855 = vadd.s32 %v793, 496
          %v856 = vadd.s32 %v793, 504
          %v857 = vstv %s276
          %vm858 = vcmp.lt.s32.totalorder %v793, %v857
          %vm859 = vcmp.lt.s32.totalorder %v794, %v857
          %vm860 = vcmp.lt.s32.totalorder %v795, %v857
          %vm861 = vcmp.lt.s32.totalorder %v796, %v857
          %vm862 = vcmp.lt.s32.totalorder %v797, %v857
          %vm863 = vcmp.lt.s32.totalorder %v798, %v857
          %vm864 = vcmp.lt.s32.totalorder %v799, %v857
          %vm865 = vcmp.lt.s32.totalorder %v800, %v857
          %vm866 = vcmp.lt.s32.totalorder %v801, %v857
          %vm867 = vcmp.lt.s32.totalorder %v802, %v857
          %vm868 = vcmp.lt.s32.totalorder %v803, %v857
          %vm869 = vcmp.lt.s32.totalorder %v804, %v857
          %vm870 = vcmp.lt.s32.totalorder %v805, %v857
          %vm871 = vcmp.lt.s32.totalorder %v806, %v857
          %vm872 = vcmp.lt.s32.totalorder %v807, %v857
          %vm873 = vcmp.lt.s32.totalorder %v808, %v857
          %vm874 = vcmp.lt.s32.totalorder %v809, %v857
          %vm875 = vcmp.lt.s32.totalorder %v810, %v857
          %vm876 = vcmp.lt.s32.totalorder %v811, %v857
          %vm877 = vcmp.lt.s32.totalorder %v812, %v857
          %vm878 = vcmp.lt.s32.totalorder %v813, %v857
          %vm879 = vcmp.lt.s32.totalorder %v814, %v857
          %vm880 = vcmp.lt.s32.totalorder %v815, %v857
          %vm881 = vcmp.lt.s32.totalorder %v816, %v857
          %vm882 = vcmp.lt.s32.totalorder %v817, %v857
          %vm883 = vcmp.lt.s32.totalorder %v818, %v857
          %vm884 = vcmp.lt.s32.totalorder %v819, %v857
          %vm885 = vcmp.lt.s32.totalorder %v820, %v857
          %vm886 = vcmp.lt.s32.totalorder %v821, %v857
          %vm887 = vcmp.lt.s32.totalorder %v822, %v857
          %vm888 = vcmp.lt.s32.totalorder %v823, %v857
          %vm889 = vcmp.lt.s32.totalorder %v824, %v857
          %vm890 = vcmp.lt.s32.totalorder %v825, %v857
          %vm891 = vcmp.lt.s32.totalorder %v826, %v857
          %vm892 = vcmp.lt.s32.totalorder %v827, %v857
          %vm893 = vcmp.lt.s32.totalorder %v828, %v857
          %vm894 = vcmp.lt.s32.totalorder %v829, %v857
          %vm895 = vcmp.lt.s32.totalorder %v830, %v857
          %vm896 = vcmp.lt.s32.totalorder %v831, %v857
          %vm897 = vcmp.lt.s32.totalorder %v832, %v857
          %vm898 = vcmp.lt.s32.totalorder %v833, %v857
          %vm899 = vcmp.lt.s32.totalorder %v834, %v857
          %vm900 = vcmp.lt.s32.totalorder %v835, %v857
          %vm901 = vcmp.lt.s32.totalorder %v836, %v857
          %vm902 = vcmp.lt.s32.totalorder %v837, %v857
          %vm903 = vcmp.lt.s32.totalorder %v838, %v857
          %vm904 = vcmp.lt.s32.totalorder %v839, %v857
          %vm905 = vcmp.lt.s32.totalorder %v840, %v857
          %vm906 = vcmp.lt.s32.totalorder %v841, %v857
          %vm907 = vcmp.lt.s32.totalorder %v842, %v857
          %vm908 = vcmp.lt.s32.totalorder %v843, %v857
          %vm909 = vcmp.lt.s32.totalorder %v844, %v857
          %vm910 = vcmp.lt.s32.totalorder %v845, %v857
          %vm911 = vcmp.lt.s32.totalorder %v846, %v857
          %vm912 = vcmp.lt.s32.totalorder %v847, %v857
          %vm913 = vcmp.lt.s32.totalorder %v848, %v857
          %vm914 = vcmp.lt.s32.totalorder %v849, %v857
          %vm915 = vcmp.lt.s32.totalorder %v850, %v857
          %vm916 = vcmp.lt.s32.totalorder %v851, %v857
          %vm917 = vcmp.lt.s32.totalorder %v852, %v857
          %vm918 = vcmp.lt.s32.totalorder %v853, %v857
          %vm919 = vcmp.lt.s32.totalorder %v854, %v857
          %vm920 = vcmp.lt.s32.totalorder %v855, %v857
          %vm921 = vcmp.lt.s32.totalorder %v856, %v857
          %v922 = vsel %vm858, %v209, 0.0
          %v923 = vsel %vm859, %v210, 0.0
          %v924 = vsel %vm860, %v211, 0.0
          %v925 = vsel %vm861, %v212, 0.0
          %v926 = vsel %vm862, %v213, 0.0
          %v927 = vsel %vm863, %v214, 0.0
          %v928 = vsel %vm864, %v215, 0.0
          %v929 = vsel %vm865, %v216, 0.0
          %v930 = vsel %vm866, %v217, 0.0
          %v931 = vsel %vm867, %v218, 0.0
          %v932 = vsel %vm868, %v219, 0.0
          %v933 = vsel %vm869, %v220, 0.0
          %v934 = vsel %vm870, %v221, 0.0
          %v935 = vsel %vm871, %v222, 0.0
          %v936 = vsel %vm872, %v223, 0.0
          %v937 = vsel %vm873, %v224, 0.0
          %v938 = vsel %vm874, %v225, 0.0
          %v939 = vsel %vm875, %v226, 0.0
          %v940 = vsel %vm876, %v227, 0.0
          %v941 = vsel %vm877, %v228, 0.0
          %v942 = vsel %vm878, %v229, 0.0
          %v943 = vsel %vm879, %v230, 0.0
          %v944 = vsel %vm880, %v231, 0.0
          %v945 = vsel %vm881, %v232, 0.0
          %v946 = vsel %vm882, %v233, 0.0
          %v947 = vsel %vm883, %v234, 0.0
          %v948 = vsel %vm884, %v235, 0.0
          %v949 = vsel %vm885, %v236, 0.0
          %v950 = vsel %vm886, %v237, 0.0
          %v951 = vsel %vm887, %v238, 0.0
          %v952 = vsel %vm888, %v239, 0.0
          %v953 = vsel %vm889, %v240, 0.0
          %v954 = vsel %vm890, %v241, 0.0
          %v955 = vsel %vm891, %v242, 0.0
          %v956 = vsel %vm892, %v243, 0.0
          %v957 = vsel %vm893, %v244, 0.0
          %v958 = vsel %vm894, %v245, 0.0
          %v959 = vsel %vm895, %v246, 0.0
          %v960 = vsel %vm896, %v247, 0.0
          %v961 = vsel %vm897, %v248, 0.0
          %v962 = vsel %vm898, %v249, 0.0
          %v963 = vsel %vm899, %v250, 0.0
          %v964 = vsel %vm900, %v251, 0.0
          %v965 = vsel %vm901, %v252, 0.0
          %v966 = vsel %vm902, %v253, 0.0
          %v967 = vsel %vm903, %v254, 0.0
          %v968 = vsel %vm904, %v255, 0.0
          %v969 = vsel %vm905, %v256, 0.0
          %v970 = vsel %vm906, %v257, 0.0
          %v971 = vsel %vm907, %v258, 0.0
          %v972 = vsel %vm908, %v259, 0.0
          %v973 = vsel %vm909, %v260, 0.0
          %v974 = vsel %vm910, %v261, 0.0
          %v975 = vsel %vm911, %v262, 0.0
          %v976 = vsel %vm912, %v263, 0.0
          %v977 = vsel %vm913, %v264, 0.0
          %v978 = vsel %vm914, %v265, 0.0
          %v979 = vsel %vm915, %v266, 0.0
          %v980 = vsel %vm916, %v267, 0.0
          %v981 = vsel %vm917, %v268, 0.0
          %v982 = vsel %vm918, %v269, 0.0
          %v983 = vsel %vm919, %v270, 0.0
          %v984 = vsel %vm920, %v271, 0.0
          %v985 = vsel %vm921, %v272, 0.0
          %986 = vmatprep.subr.mxu0 0.0
          %987 = vmatpush1.msra.mxu0 %v922
          %988 = vmatprep.subr.mxu0 0.0
          %989 = vmatpush1.msra.mxu0 %v923
          %990 = vmatprep.subr.mxu0 0.0
          %991 = vmatpush1.msra.mxu0 %v924
          %992 = vmatprep.subr.mxu0 0.0
          %993 = vmatpush1.msra.mxu0 %v925
          %994 = vmatprep.subr.mxu0 0.0
          %995 = vmatpush1.msra.mxu0 %v926
          %996 = vmatprep.subr.mxu0 0.0
          %997 = vmatpush1.msra.mxu0 %v927
          %998 = vmatprep.subr.mxu0 0.0
          %999 = vmatpush1.msra.mxu0 %v928
          %1000 = vmatprep.subr.mxu0 0.0
          %1001 = vmatpush1.msra.mxu0 %v929
          %1002 = vmatprep.subr.mxu0 0.0
          %1003 = vmatpush1.msra.mxu0 %v930
          %1004 = vmatprep.subr.mxu0 0.0
          %1005 = vmatpush1.msra.mxu0 %v931
          %1006 = vmatprep.subr.mxu0 0.0
          %1007 = vmatpush1.msra.mxu0 %v932
          %1008 = vmatprep.subr.mxu0 0.0
          %1009 = vmatpush1.msra.mxu0 %v933
          %1010 = vmatprep.subr.mxu0 0.0
          %1011 = vmatpush1.msra.mxu0 %v934
          %1012 = vmatprep.subr.mxu0 0.0
          %1013 = vmatpush1.msra.mxu0 %v935
          %1014 = vmatprep.subr.mxu0 0.0
          %1015 = vmatpush1.msra.mxu0 %v936
          %1016 = vmatprep.subr.mxu0 0.0
          %1017 = vmatpush1.msra.mxu0 %v937
          %1018 = vmatprep.subr.mxu0 0.0
          %1019 = vmatpush1.msra.mxu0 %v938
          %1020 = vmatprep.subr.mxu0 0.0
          %1021 = vmatpush1.msra.mxu0 %v939
          %1022 = vmatprep.subr.mxu0 0.0
          %1023 = vmatpush1.msra.mxu0 %v940
          %1024 = vmatprep.subr.mxu0 0.0
          %1025 = vmatpush1.msra.mxu0 %v941
          %1026 = vmatprep.subr.mxu0 0.0
          %1027 = vmatpush1.msra.mxu0 %v942
          %1028 = vmatprep.subr.mxu0 0.0
          %1029 = vmatpush1.msra.mxu0 %v943
          %1030 = vmatprep.subr.mxu0 0.0
          %1031 = vmatpush1.msra.mxu0 %v944
          %1032 = vmatprep.subr.mxu0 0.0
          %1033 = vmatpush1.msra.mxu0 %v945
          %1034 = vmatprep.subr.mxu0 0.0
          %1035 = vmatpush1.msra.mxu0 %v946
          %1036 = vmatprep.subr.mxu0 0.0
          %1037 = vmatpush1.msra.mxu0 %v947
          %1038 = vmatprep.subr.mxu0 0.0
          %1039 = vmatpush1.msra.mxu0 %v948
          %1040 = vmatprep.subr.mxu0 0.0
          %1041 = vmatpush1.msra.mxu0 %v949
          %1042 = vmatprep.subr.mxu0 0.0
          %1043 = vmatpush1.msra.mxu0 %v950
          %1044 = vmatprep.subr.mxu0 0.0
          %1045 = vmatpush1.msra.mxu0 %v951
          %1046 = vmatprep.subr.mxu0 0.0
          %1047 = vmatpush1.msra.mxu0 %v952
          %1048 = vmatprep.subr.mxu0 0.0
          %1049 = vmatpush1.msra.mxu0 %v953
          %1050 = vmatprep.mubr.f32.mxu0 1.0
          %1051 = vmatmul.mubr.f32.gmra.mrb[0].mxu0 1.0
          %v1052 = vpop.f32.mrb[0].mxu0
          %v1053 = vadd.f32 0.0, %v1052
          %v1054 = vpop.f32.mrb[0].mxu0
          %1055 = vdwg.mxu0
          %1056 = vmatprep.subr.mxu0 0.0
          %1057 = vmatpush1.msra.mxu0 %v954
          %1058 = vmatprep.subr.mxu0 0.0
          %1059 = vmatpush1.msra.mxu0 %v955
          %1060 = vmatprep.subr.mxu0 0.0
          %1061 = vmatpush1.msra.mxu0 %v956
          %1062 = vmatprep.subr.mxu0 0.0
          %1063 = vmatpush1.msra.mxu0 %v957
          %1064 = vmatprep.subr.mxu0 0.0
          %1065 = vmatpush1.msra.mxu0 %v958
          %1066 = vmatprep.subr.mxu0 0.0
          %1067 = vmatpush1.msra.mxu0 %v959
          %1068 = vmatprep.subr.mxu0 0.0
          %1069 = vmatpush1.msra.mxu0 %v960
          %1070 = vmatprep.subr.mxu0 0.0
          %1071 = vmatpush1.msra.mxu0 %v961
          %1072 = vmatprep.subr.mxu0 0.0
          %1073 = vmatpush1.msra.mxu0 %v962
          %1074 = vmatprep.subr.mxu0 0.0
          %1075 = vmatpush1.msra.mxu0 %v963
          %1076 = vmatprep.subr.mxu0 0.0
          %1077 = vmatpush1.msra.mxu0 %v964
          %1078 = vmatprep.subr.mxu0 0.0
          %1079 = vmatpush1.msra.mxu0 %v965
          %1080 = vmatprep.subr.mxu0 0.0
          %1081 = vmatpush1.msra.mxu0 %v966
          %1082 = vmatprep.subr.mxu0 0.0
          %1083 = vmatpush1.msra.mxu0 %v967
          %1084 = vmatprep.subr.mxu0 0.0
          %1085 = vmatpush1.msra.mxu0 %v968
          %1086 = vmatprep.subr.mxu0 0.0
          %1087 = vmatpush1.msra.mxu0 %v969
          %1088 = vmatprep.subr.mxu0 0.0
          %1089 = vmatpush1.msra.mxu0 %v970
          %1090 = vmatprep.subr.mxu0 0.0
          %1091 = vmatpush1.msra.mxu0 %v971
          %1092 = vmatprep.subr.mxu0 0.0
          %1093 = vmatpush1.msra.mxu0 %v972
          %1094 = vmatprep.subr.mxu0 0.0
          %1095 = vmatpush1.msra.mxu0 %v973
          %1096 = vmatprep.subr.mxu0 0.0
          %1097 = vmatpush1.msra.mxu0 %v974
          %1098 = vmatprep.subr.mxu0 0.0
          %1099 = vmatpush1.msra.mxu0 %v975
          %1100 = vmatprep.subr.mxu0 0.0
          %1101 = vmatpush1.msra.mxu0 %v976
          %1102 = vmatprep.subr.mxu0 0.0
          %1103 = vmatpush1.msra.mxu0 %v977
          %1104 = vmatprep.subr.mxu0 0.0
          %1105 = vmatpush1.msra.mxu0 %v978
          %1106 = vmatprep.subr.mxu0 0.0
          %1107 = vmatpush1.msra.mxu0 %v979
          %1108 = vmatprep.subr.mxu0 0.0
          %1109 = vmatpush1.msra.mxu0 %v980
          %1110 = vmatprep.subr.mxu0 0.0
          %1111 = vmatpush1.msra.mxu0 %v981
          %1112 = vmatprep.subr.mxu0 0.0
          %1113 = vmatpush1.msra.mxu0 %v982
          %1114 = vmatprep.subr.mxu0 0.0
          %1115 = vmatpush1.msra.mxu0 %v983
          %1116 = vmatprep.subr.mxu0 0.0
          %1117 = vmatpush1.msra.mxu0 %v984
          %1118 = vmatprep.subr.mxu0 0.0
          %1119 = vmatpush1.msra.mxu0 %v985
          %1120 = vmatprep.mubr.f32.mxu0 1.0
          %1121 = vmatmul.mubr.f32.gmra.mrb[0].mxu0 1.0
          %v1122 = vpop.f32.mrb[0].mxu0
          %v1123 = vadd.f32 %v1053, %v1122
          %v1124 = vpop.f32.mrb[0].mxu0
          %1125 = vdwg.mxu0
          %1126 = vxpose.xlu0.b32.start [1/16] %v922, 128
          %1127 = vxpose.xlu0.b32.cont [2/16] %v923, 128
          %1128 = vxpose.xlu0.b32.cont [3/16] %v924, 128
          %1129 = vxpose.xlu0.b32.cont [4/16] %v925, 128
          %1130 = vxpose.xlu0.b32.cont [5/16] %v926, 128
          %1131 = vxpose.xlu0.b32.cont [6/16] %v927, 128
          %1132 = vxpose.xlu0.b32.cont [7/16] %v928, 128
          %1133 = vxpose.xlu0.b32.cont [8/16] %v929, 128
          %1134 = vxpose.xlu0.b32.cont [9/16] %v930, 128
          %1135 = vxpose.xlu0.b32.cont [10/16] %v931, 128
          %1136 = vxpose.xlu0.b32.cont [11/16] %v932, 128
          %1137 = vxpose.xlu0.b32.cont [12/16] %v933, 128
          %1138 = vxpose.xlu0.b32.cont [13/16] %v934, 128
          %1139 = vxpose.xlu0.b32.cont [14/16] %v935, 128
          %1140 = vxpose.xlu0.b32.cont [15/16] %v936, 128
          %1141 = vxpose.xlu0.b32.end [16/16] %v937, 128
          %v1142 = vpop.trf.xlu0
          %v1143 = vpop.trf.xlu0
          %v1144 = vpop.trf.xlu0
          %v1145 = vpop.trf.xlu0
          %v1146 = vpop.trf.xlu0
          %v1147 = vpop.trf.xlu0
          %v1148 = vpop.trf.xlu0
          %v1149 = vpop.trf.xlu0
          %v1150 = vpop.trf.xlu0
          %v1151 = vpop.trf.xlu0
          %v1152 = vpop.trf.xlu0
          %v1153 = vpop.trf.xlu0
          %v1154 = vpop.trf.xlu0
          %v1155 = vpop.trf.xlu0
          %v1156 = vpop.trf.xlu0
          %v1157 = vpop.trf.xlu0
          %1158 = vxpose.xlu0.b32.start [1/16] %v938, 128
          %1159 = vxpose.xlu0.b32.cont [2/16] %v939, 128
          %1160 = vxpose.xlu0.b32.cont [3/16] %v940, 128
          %1161 = vxpose.xlu0.b32.cont [4/16] %v941, 128
          %1162 = vxpose.xlu0.b32.cont [5/16] %v942, 128
          %1163 = vxpose.xlu0.b32.cont [6/16] %v943, 128
          %1164 = vxpose.xlu0.b32.cont [7/16] %v944, 128
          %1165 = vxpose.xlu0.b32.cont [8/16] %v945, 128
          %1166 = vxpose.xlu0.b32.cont [9/16] %v946, 128
          %1167 = vxpose.xlu0.b32.cont [10/16] %v947, 128
          %1168 = vxpose.xlu0.b32.cont [11/16] %v948, 128
          %1169 = vxpose.xlu0.b32.cont [12/16] %v949, 128
          %1170 = vxpose.xlu0.b32.cont [13/16] %v950, 128
          %1171 = vxpose.xlu0.b32.cont [14/16] %v951, 128
          %1172 = vxpose.xlu0.b32.cont [15/16] %v952, 128
          %1173 = vxpose.xlu0.b32.end [16/16] %v953, 128
          %v1174 = vpop.trf.xlu0
          %v1175 = vpop.trf.xlu0
          %v1176 = vpop.trf.xlu0
          %v1177 = vpop.trf.xlu0
          %v1178 = vpop.trf.xlu0
          %v1179 = vpop.trf.xlu0
          %v1180 = vpop.trf.xlu0
          %v1181 = vpop.trf.xlu0
          %v1182 = vpop.trf.xlu0
          %v1183 = vpop.trf.xlu0
          %v1184 = vpop.trf.xlu0
          %v1185 = vpop.trf.xlu0
          %v1186 = vpop.trf.xlu0
          %v1187 = vpop.trf.xlu0
          %v1188 = vpop.trf.xlu0
          %v1189 = vpop.trf.xlu0
          %1190 = vxpose.xlu0.b32.start [1/16] %v954, 128
          %1191 = vxpose.xlu0.b32.cont [2/16] %v955, 128
          %1192 = vxpose.xlu0.b32.cont [3/16] %v956, 128
          %1193 = vxpose.xlu0.b32.cont [4/16] %v957, 128
          %1194 = vxpose.xlu0.b32.cont [5/16] %v958, 128
          %1195 = vxpose.xlu0.b32.cont [6/16] %v959, 128
          %1196 = vxpose.xlu0.b32.cont [7/16] %v960, 128
          %1197 = vxpose.xlu0.b32.cont [8/16] %v961, 128
          %1198 = vxpose.xlu0.b32.cont [9/16] %v962, 128
          %1199 = vxpose.xlu0.b32.cont [10/16] %v963, 128
          %1200 = vxpose.xlu0.b32.cont [11/16] %v964, 128
          %1201 = vxpose.xlu0.b32.cont [12/16] %v965, 128
          %1202 = vxpose.xlu0.b32.cont [13/16] %v966, 128
          %1203 = vxpose.xlu0.b32.cont [14/16] %v967, 128
          %1204 = vxpose.xlu0.b32.cont [15/16] %v968, 128
          %1205 = vxpose.xlu0.b32.end [16/16] %v969, 128
          %v1206 = vpop.trf.xlu0
          %v1207 = vpop.trf.xlu0
          %v1208 = vpop.trf.xlu0
          %v1209 = vpop.trf.xlu0
          %v1210 = vpop.trf.xlu0
          %v1211 = vpop.trf.xlu0
          %v1212 = vpop.trf.xlu0
          %v1213 = vpop.trf.xlu0
          %v1214 = vpop.trf.xlu0
          %v1215 = vpop.trf.xlu0
          %v1216 = vpop.trf.xlu0
          %v1217 = vpop.trf.xlu0
          %v1218 = vpop.trf.xlu0
          %v1219 = vpop.trf.xlu0
          %v1220 = vpop.trf.xlu0
          %v1221 = vpop.trf.xlu0
          %1222 = vxpose.xlu0.b32.start [1/16] %v970, 128
          %1223 = vxpose.xlu0.b32.cont [2/16] %v971, 128
          %1224 = vxpose.xlu0.b32.cont [3/16] %v972, 128
          %1225 = vxpose.xlu0.b32.cont [4/16] %v973, 128
          %1226 = vxpose.xlu0.b32.cont [5/16] %v974, 128
          %1227 = vxpose.xlu0.b32.cont [6/16] %v975, 128
          %1228 = vxpose.xlu0.b32.cont [7/16] %v976, 128
          %1229 = vxpose.xlu0.b32.cont [8/16] %v977, 128
          %1230 = vxpose.xlu0.b32.cont [9/16] %v978, 128
          %1231 = vxpose.xlu0.b32.cont [10/16] %v979, 128
          %1232 = vxpose.xlu0.b32.cont [11/16] %v980, 128
          %1233 = vxpose.xlu0.b32.cont [12/16] %v981, 128
          %1234 = vxpose.xlu0.b32.cont [13/16] %v982, 128
          %1235 = vxpose.xlu0.b32.cont [14/16] %v983, 128
          %1236 = vxpose.xlu0.b32.cont [15/16] %v984, 128
          %1237 = vxpose.xlu0.b32.end [16/16] %v985, 128
          %v1238 = vpop.trf.xlu0
          %v1239 = vpop.trf.xlu0
          %v1240 = vpop.trf.xlu0
          %v1241 = vpop.trf.xlu0
          %v1242 = vpop.trf.xlu0
          %v1243 = vpop.trf.xlu0
          %v1244 = vpop.trf.xlu0
          %v1245 = vpop.trf.xlu0
          %v1246 = vpop.trf.xlu0
          %v1247 = vpop.trf.xlu0
          %v1248 = vpop.trf.xlu0
          %v1249 = vpop.trf.xlu0
          %v1250 = vpop.trf.xlu0
          %v1251 = vpop.trf.xlu0
          %v1252 = vpop.trf.xlu0
          %v1253 = vpop.trf.xlu0
          %1254 = vmatprep.subr.mxu0 0.0
          %1255 = vmatpush1.msra.mxu0 %v922
          %1256 = vmatprep.subr.mxu0 0.0
          %1257 = vmatpush1.msra.mxu0 %v923
          %1258 = vmatprep.subr.mxu0 0.0
          %1259 = vmatpush1.msra.mxu0 %v924
          %1260 = vmatprep.subr.mxu0 0.0
          %1261 = vmatpush1.msra.mxu0 %v925
          %1262 = vmatprep.subr.mxu0 0.0
          %1263 = vmatpush1.msra.mxu0 %v926
          %1264 = vmatprep.subr.mxu0 0.0
          %1265 = vmatpush1.msra.mxu0 %v927
          %1266 = vmatprep.subr.mxu0 0.0
          %1267 = vmatpush1.msra.mxu0 %v928
          %1268 = vmatprep.subr.mxu0 0.0
          %1269 = vmatpush1.msra.mxu0 %v929
          %1270 = vmatprep.subr.mxu0 0.0
          %1271 = vmatpush1.msra.mxu0 %v930
          %1272 = vmatprep.subr.mxu0 0.0
          %1273 = vmatpush1.msra.mxu0 %v931
          %1274 = vmatprep.subr.mxu0 0.0
          %1275 = vmatpush1.msra.mxu0 %v932
          %1276 = vmatprep.subr.mxu0 0.0
          %1277 = vmatpush1.msra.mxu0 %v933
          %1278 = vmatprep.subr.mxu0 0.0
          %1279 = vmatpush1.msra.mxu0 %v934
          %1280 = vmatprep.subr.mxu0 0.0
          %1281 = vmatpush1.msra.mxu0 %v935
          %1282 = vmatprep.subr.mxu0 0.0
          %1283 = vmatpush1.msra.mxu0 %v936
          %1284 = vmatprep.subr.mxu0 0.0
          %1285 = vmatpush1.msra.mxu0 %v937
          %1286 = vmatprep.subr.mxu0 0.0
          %1287 = vmatpush1.msra.mxu0 %v938
          %1288 = vmatprep.subr.mxu0 0.0
          %1289 = vmatpush1.msra.mxu0 %v939
          %1290 = vmatprep.subr.mxu0 0.0
          %1291 = vmatpush1.msra.mxu0 %v940
          %1292 = vmatprep.subr.mxu0 0.0
          %1293 = vmatpush1.msra.mxu0 %v941
          %1294 = vmatprep.subr.mxu0 0.0
          %1295 = vmatpush1.msra.mxu0 %v942
          %1296 = vmatprep.subr.mxu0 0.0
          %1297 = vmatpush1.msra.mxu0 %v943
          %1298 = vmatprep.subr.mxu0 0.0
          %1299 = vmatpush1.msra.mxu0 %v944
          %1300 = vmatprep.subr.mxu0 0.0
          %1301 = vmatpush1.msra.mxu0 %v945
          %1302 = vmatprep.subr.mxu0 0.0
          %1303 = vmatpush1.msra.mxu0 %v946
          %1304 = vmatprep.subr.mxu0 0.0
          %1305 = vmatpush1.msra.mxu0 %v947
          %1306 = vmatprep.subr.mxu0 0.0
          %1307 = vmatpush1.msra.mxu0 %v948
          %1308 = vmatprep.subr.mxu0 0.0
          %1309 = vmatpush1.msra.mxu0 %v949
          %1310 = vmatprep.subr.mxu0 0.0
          %1311 = vmatpush1.msra.mxu0 %v950
          %1312 = vmatprep.subr.mxu0 0.0
          %1313 = vmatpush1.msra.mxu0 %v951
          %1314 = vmatprep.subr.mxu0 0.0
          %1315 = vmatpush1.msra.mxu0 %v952
          %1316 = vmatprep.subr.mxu0 0.0
          %1317 = vmatpush1.msra.mxu0 %v953
          %1318 = vmatprep.mubr.f32.mxu0 %v1174
          %1319 = vmatmul.mubr.f32.gmra.mrb[0].mxu0 %v1142
          %v1320 = vpop.f32.mrb[0].mxu0
          %v1321 = vadd.f32 0.0, %v1320
          %v1322 = vpop.f32.mrb[0].mxu0
          %1323 = vmatprep.mubr.f32.mxu0 %v1175
          %1324 = vmatmul.mubr.f32.gmra.mrb[0].mxu0 %v1143
          %v1325 = vpop.f32.mrb[0].mxu0
          %v1326 = vadd.f32 0.0, %v1325
          %v1327 = vpop.f32.mrb[0].mxu0
          %1328 = vmatprep.mubr.f32.mxu0 %v1176
          %1329 = vmatmul.mubr.f32.gmra.mrb[0].mxu0 %v1144
          %v1330 = vpop.f32.mrb[0].mxu0
          %v1331 = vadd.f32 0.0, %v1330
          %v1332 = vpop.f32.mrb[0].mxu0
          %1333 = vmatprep.mubr.f32.mxu0 %v1177
          %1334 = vmatmul.mubr.f32.gmra.mrb[0].mxu0 %v1145
          %v1335 = vpop.f32.mrb[0].mxu0
          %v1336 = vadd.f32 0.0, %v1335
          %v1337 = vpop.f32.mrb[0].mxu0
          %1338 = vmatprep.mubr.f32.mxu0 %v1178
          %1339 = vmatmul.mubr.f32.gmra.mrb[0].mxu0 %v1146
          %v1340 = vpop.f32.mrb[0].mxu0
          %v1341 = vadd.f32 0.0, %v1340
          %v1342 = vpop.f32.mrb[0].mxu0
          %1343 = vmatprep.mubr.f32.mxu0 %v1179
          %1344 = vmatmul.mubr.f32.gmra.mrb[0].mxu0 %v1147
          %v1345 = vpop.f32.mrb[0].mxu0
          %v1346 = vadd.f32 0.0, %v1345
          %v1347 = vpop.f32.mrb[0].mxu0
          %1348 = vmatprep.mubr.f32.mxu0 %v1180
          %1349 = vmatmul.mubr.f32.gmra.mrb[0].mxu0 %v1148
          %v1350 = vpop.f32.mrb[0].mxu0
          %v1351 = vadd.f32 0.0, %v1350
          %v1352 = vpop.f32.mrb[0].mxu0
          %1353 = vmatprep.mubr.f32.mxu0 %v1181
          %1354 = vmatmul.mubr.f32.gmra.mrb[0].mxu0 %v1149
          %v1355 = vpop.f32.mrb[0].mxu0
          %v1356 = vadd.f32 0.0, %v1355
          %v1357 = vpop.f32.mrb[0].mxu0
          %1358 = vdwg.mxu0
          %1359 = vmatprep.subr.mxu0 0.0
          %1360 = vmatpush1.msra.mxu0 %v954
          %1361 = vmatprep.subr.mxu0 0.0
          %1362 = vmatpush1.msra.mxu0 %v955
          %1363 = vmatprep.subr.mxu0 0.0
          %1364 = vmatpush1.msra.mxu0 %v956
          %1365 = vmatprep.subr.mxu0 0.0
          %1366 = vmatpush1.msra.mxu0 %v957
          %1367 = vmatprep.subr.mxu0 0.0
          %1368 = vmatpush1.msra.mxu0 %v958
          %1369 = vmatprep.subr.mxu0 0.0
          %1370 = vmatpush1.msra.mxu0 %v959
          %1371 = vmatprep.subr.mxu0 0.0
          %1372 = vmatpush1.msra.mxu0 %v960
          %1373 = vmatprep.subr.mxu0 0.0
          %1374 = vmatpush1.msra.mxu0 %v961
          %1375 = vmatprep.subr.mxu0 0.0
          %1376 = vmatpush1.msra.mxu0 %v962
          %1377 = vmatprep.subr.mxu0 0.0
          %1378 = vmatpush1.msra.mxu0 %v963
          %1379 = vmatprep.subr.mxu0 0.0
          %1380 = vmatpush1.msra.mxu0 %v964
          %1381 = vmatprep.subr.mxu0 0.0
          %1382 = vmatpush1.msra.mxu0 %v965
          %1383 = vmatprep.subr.mxu0 0.0
          %1384 = vmatpush1.msra.mxu0 %v966
          %1385 = vmatprep.subr.mxu0 0.0
          %1386 = vmatpush1.msra.mxu0 %v967
          %1387 = vmatprep.subr.mxu0 0.0
          %1388 = vmatpush1.msra.mxu0 %v968
          %1389 = vmatprep.subr.mxu0 0.0
          %1390 = vmatpush1.msra.mxu0 %v969
          %1391 = vmatprep.subr.mxu0 0.0
          %1392 = vmatpush1.msra.mxu0 %v970
          %1393 = vmatprep.subr.mxu0 0.0
          %1394 = vmatpush1.msra.mxu0 %v971
          %1395 = vmatprep.subr.mxu0 0.0
          %1396 = vmatpush1.msra.mxu0 %v972
          %1397 = vmatprep.subr.mxu0 0.0
          %1398 = vmatpush1.msra.mxu0 %v973
          %1399 = vmatprep.subr.mxu0 0.0
          %1400 = vmatpush1.msra.mxu0 %v974
          %1401 = vmatprep.subr.mxu0 0.0
          %1402 = vmatpush1.msra.mxu0 %v975
          %1403 = vmatprep.subr.mxu0 0.0
          %1404 = vmatpush1.msra.mxu0 %v976
          %1405 = vmatprep.subr.mxu0 0.0
          %1406 = vmatpush1.msra.mxu0 %v977
          %1407 = vmatprep.subr.mxu0 0.0
          %1408 = vmatpush1.msra.mxu0 %v978
          %1409 = vmatprep.subr.mxu0 0.0
          %1410 = vmatpush1.msra.mxu0 %v979
          %1411 = vmatprep.subr.mxu0 0.0
          %1412 = vmatpush1.msra.mxu0 %v980
          %1413 = vmatprep.subr.mxu0 0.0
          %1414 = vmatpush1.msra.mxu0 %v981
          %1415 = vmatprep.subr.mxu0 0.0
          %1416 = vmatpush1.msra.mxu0 %v982
          %1417 = vmatprep.subr.mxu0 0.0
          %1418 = vmatpush1.msra.mxu0 %v983
          %1419 = vmatprep.subr.mxu0 0.0
          %1420 = vmatpush1.msra.mxu0 %v984
          %1421 = vmatprep.subr.mxu0 0.0
          %1422 = vmatpush1.msra.mxu0 %v985
          %1423 = vmatprep.mubr.f32.mxu0 %v1238
          %1424 = vmatmul.mubr.f32.gmra.mrb[0].mxu0 %v1206
          %v1425 = vpop.f32.mrb[0].mxu0
          %v1426 = vadd.f32 %v1321, %v1425
          %v1427 = vpop.f32.mrb[0].mxu0
          %1428 = vmatprep.mubr.f32.mxu0 %v1239
          %1429 = vmatmul.mubr.f32.gmra.mrb[0].mxu0 %v1207
          %v1430 = vpop.f32.mrb[0].mxu0
          %v1431 = vadd.f32 %v1326, %v1430
          %v1432 = vpop.f32.mrb[0].mxu0
          %1433 = vmatprep.mubr.f32.mxu0 %v1240
          %1434 = vmatmul.mubr.f32.gmra.mrb[0].mxu0 %v1208
          %v1435 = vpop.f32.mrb[0].mxu0
          %v1436 = vadd.f32 %v1331, %v1435
          %v1437 = vpop.f32.mrb[0].mxu0
          %1438 = vmatprep.mubr.f32.mxu0 %v1241
          %1439 = vmatmul.mubr.f32.gmra.mrb[0].mxu0 %v1209
          %v1440 = vpop.f32.mrb[0].mxu0
          %v1441 = vadd.f32 %v1336, %v1440
          %v1442 = vpop.f32.mrb[0].mxu0
          %1443 = vmatprep.mubr.f32.mxu0 %v1242
          %1444 = vmatmul.mubr.f32.gmra.mrb[0].mxu0 %v1210
          %v1445 = vpop.f32.mrb[0].mxu0
          %v1446 = vadd.f32 %v1341, %v1445
          %v1447 = vpop.f32.mrb[0].mxu0
          %1448 = vmatprep.mubr.f32.mxu0 %v1243
          %1449 = vmatmul.mubr.f32.gmra.mrb[0].mxu0 %v1211
          %v1450 = vpop.f32.mrb[0].mxu0
          %v1451 = vadd.f32 %v1346, %v1450
          %v1452 = vpop.f32.mrb[0].mxu0
          %1453 = vmatprep.mubr.f32.mxu0 %v1244
          %1454 = vmatmul.mubr.f32.gmra.mrb[0].mxu0 %v1212
          %v1455 = vpop.f32.mrb[0].mxu0
          %v1456 = vadd.f32 %v1351, %v1455
          %v1457 = vpop.f32.mrb[0].mxu0
          %1458 = vmatprep.mubr.f32.mxu0 %v1245
          %1459 = vmatmul.mubr.f32.gmra.mrb[0].mxu0 %v1213
          %v1460 = vpop.f32.mrb[0].mxu0
          %v1461 = vadd.f32 %v1356, %v1460
          %v1462 = vpop.f32.mrb[0].mxu0
          %1463 = vdwg.mxu0
          %v1464 = vld [vmem:[%s172] sm:$0x1]
          %v1465 = vadd.f32 %v1464, %v1123
          %vm1466 = vcmask 516096
          %1467 = vst.msk [vmem:[%s172] sm:$0x1] %vm1466, %v1465
          %v1468 = vld [vmem:[%s179] sm:$0xff]
          %v1469 = vld [vmem:[%s179 + $0x8] sm:$0xff]
          %v1470 = vld [vmem:[%s179 + $0x10] sm:$0xff]
          %v1471 = vld [vmem:[%s179 + $0x18] sm:$0xff]
          %v1472 = vld [vmem:[%s179 + $0x20] sm:$0xff]
          %v1473 = vld [vmem:[%s179 + $0x28] sm:$0xff]
          %v1474 = vld [vmem:[%s179 + $0x30] sm:$0xff]
          %v1475 = vld [vmem:[%s179 + $0x38] sm:$0xff]
          %v1476 = vadd.f32 %v1468, %v1426
          %v1477 = vadd.f32 %v1469, %v1431
          %v1478 = vadd.f32 %v1470, %v1436
          %v1479 = vadd.f32 %v1471, %v1441
          %v1480 = vadd.f32 %v1472, %v1446
          %v1481 = vadd.f32 %v1473, %v1451
          %v1482 = vadd.f32 %v1474, %v1456
          %v1483 = vadd.f32 %v1475, %v1461
          %vm1484 = vcmask 523264
          %1485 = vst.msk [vmem:[%s179] sm:$0xff] %vm1484, %v1476
          %1486 = vst.msk [vmem:[%s179 + $0x8] sm:$0xff] %vm1484, %v1477
          %1487 = vst.msk [vmem:[%s179 + $0x10] sm:$0xff] %vm1484, %v1478
          %1488 = vst.msk [vmem:[%s179 + $0x18] sm:$0xff] %vm1484, %v1479
          %1489 = vst.msk [vmem:[%s179 + $0x20] sm:$0xff] %vm1484, %v1480
          %1490 = vst.msk [vmem:[%s179 + $0x28] sm:$0xff] %vm1484, %v1481
          %1491 = vst.msk [vmem:[%s179 + $0x30] sm:$0xff] %vm1484, %v1482
          %1492 = vst.msk [vmem:[%s179 + $0x38] sm:$0xff] %vm1484, %v1483
        $region36: #{tpu_custom_call.1} parent=23 // pred_fallthru
          _
        %s1493 = sand.u32 %s74, 1
        %s1494 = scalar_lea.sflag [#allocation3], %s1493
        %s1495 = sand.u32 %s74, 1
        %s1496 = scalar_lea.vmem [#allocation2], %s1495
        %s1497 = sand.u32 %s100, 1
        %s1498 = scalar_lea.sflag [#allocation5], %s1497
        %s1499 = sand.u32 %s100, 1
        %s1500 = smul.addr %s1499, 64
        %s1501 = scalar_lea.vmem [#allocation4], %s1500
        // Predicated region
        $region37: #{tpu_custom_call.1} parent=23 // pred_check
          %p1502 = pneg %p84
        $region38: #{tpu_custom_call.1} parent=23 // pred_check_branch
          %1504 = sbr.rel (%p1502) target = $region40
        $region39: #{tpu_custom_call.1} parent=23 // pred_region
          %s1506 = ssub.s32 16, 16
          %1507 = vsyncadd %s1494, %s1506
          %s1508 = smul.addr %s24, 16
          %s1509 = scalar_lea.hbm %s1, %s1508
          %s1511 = sshll.u32 %s1496, 4
          %s1512 = int_to_ptr.vmem [resolvable:$true] %s1511
          %1514 = dma.vmem_to_hbm [thread:$0]  %s1512, 16, %s1509, %s1494
        $region40: #{tpu_custom_call.1} parent=23 // pred_fallthru
          _
        // Predicated region
        $region41: #{tpu_custom_call.1} parent=23 // pred_check
          %p1515 = pneg %p110
        $region42: #{tpu_custom_call.1} parent=23 // pred_check_branch
          %1517 = sbr.rel (%p1515) target = $region44
        $region43: #{tpu_custom_call.1} parent=23 // pred_region
          %s1519 = ssub.s32 1024, 1024
          %1520 = vsyncadd %s1498, %s1519
          %s1521 = smul.addr %s24, 8
          %s1522 = smul.addr %s1521, 128
          %s1523 = scalar_lea.hbm %s2, %s1522
          %s1524 = sshll.u32 %s1501, 4
          %s1525 = int_to_ptr.vmem [resolvable:$true] %s1524
          %1530 = dma.vmem_to_hbm [thread:$0]  %s1525, 1024, %s1523, %s1498, 128, 128, 8
        $region44: #{tpu_custom_call.1} parent=23 // pred_fallthru
          _
      $region24: #{tpu_custom_call.1} parent=5 // pred_fallthru
        _
      %p1531 = scmp.le.s32.totalorder 2, %s15
      // Predicated region
      $region45: #{tpu_custom_call.1} parent=5 // pred_check
        %p1532 = pneg %p1531
      $region46: #{tpu_custom_call.1} parent=5 // pred_check_branch
        %1534 = sbr.rel (%p1532) target = $region48
      $region47: #{tpu_custom_call.1} parent=5 // pred_region
        %s1535 = ssub.s32 %s15, 2
        // Predicated region
        $region49: #{tpu_custom_call.1} parent=47 // pred_check
          %p1536 = pneg %p90
        $region50: #{tpu_custom_call.1} parent=47 // pred_check_branch
          %1538 = sbr.rel (%p1536) target = $region52
        $region51: #{tpu_custom_call.1} parent=47 // pred_region
          %s1539 = sand.u32 %s75, 1
          %s1540 = scalar_lea.sflag [#allocation3], %s1539
          %s1541 = sand.u32 %s75, 1
          %s1542 = scalar_lea.vmem [#allocation2], %s1541
          %1543 = dma.done %s1540, 16
        $region52: #{tpu_custom_call.1} parent=47 // pred_fallthru
          _
        // Predicated region
        $region53: #{tpu_custom_call.1} parent=47 // pred_check
          %p1544 = pneg %p116
        $region54: #{tpu_custom_call.1} parent=47 // pred_check_branch
          %1546 = sbr.rel (%p1544) target = $region56
        $region55: #{tpu_custom_call.1} parent=47 // pred_region
          %s1547 = sand.u32 %s101, 1
          %s1548 = scalar_lea.sflag [#allocation5], %s1547
          %s1549 = sand.u32 %s101, 1
          %s1550 = smul.addr %s1549, 64
          %s1551 = scalar_lea.vmem [#allocation4], %s1550
          %1552 = dma.done %s1548, 1024
        $region56: #{tpu_custom_call.1} parent=47 // pred_fallthru
          _
      $region48: #{tpu_custom_call.1} parent=5 // pred_fallthru
        _
    $region6: #{tpu_custom_call.1} parent=1 // loop_footer
      %s19 = sadd.s32 1, %s15
    $region7: #{tpu_custom_call.1} parent=1 // loop_footer_branch
      %14 = sbr.rel target = $region3
    $region8: #{tpu_custom_call.1} parent=1 // loop_exit
      _
    %1553 = vsyncpa [#allocation3], 1
    %s1554 = scalar_lea.sflag [#allocation3], 1
    %1555 = vsyncpa %s1554, 1
    %1556 = vsyncpa [#allocation5], 1
    %s1557 = scalar_lea.sflag [#allocation5], 1
    %1558 = vsyncpa %s1557, 1

</llo_original>
